<compile_context>
chip_gen: v7x
topology: tpu7x:2x2x1
jax: 0.10.0
libtpu: 0.0.40
codegen_flags: <defaults>
</compile_context>

<pallas_src>
from typing import NamedTuple

import jax
import jax.numpy as jnp
from jax.experimental import pallas as pl
from jax.experimental.pallas import tpu as pltpu


class Latents(NamedTuple):
    sensors_h: jax.Array   # (S, B, hidden)
    sensors_c: jax.Array   # (S, B, hidden)
    output: jax.Array      # (S, B, L, C)


# ----------------------------- Pallas kernel -----------------------------

def _fused_step_kernel(sid_ref, x_ref, h_ref, c_ref, prev_out_ref,
                       w_ref, b_ref, w1_ref, b1_ref, w2_ref, b2_ref,
                       h_out_ref, c_out_ref, out_ref):
    """Fused projection + LSTMCell + residual + block-diag MLP for one sensor.

    x   : (B, L*C)       raw flattened features (projection folded into w)
    h,c : (B, H)         sensor_id slice of the latent state (via BlockSpec)
    w   : (L*C+H, 4H)    bf16 stacked [w_x_fused ; w_h], gate-concatenated
    b   : (1, 4H)        f32 b_ih + b_hh + projection-bias contribution
    w1  : (H, L*C4)      bf16 block-diag MLP layer 1
    w2  : (L*C4, L*C)    bf16 block-diag MLP layer 2
    out : (B, L*C)       lane-dense MLP output (written into aliased latent slab)
    """
    del sid_ref, prev_out_ref                      # sid used only in index_maps
    LC = x_ref.shape[1]
    H = h_ref.shape[1]

    x = x_ref[...].astype(jnp.bfloat16)
    h = h_ref[...]                                  # f32
    c = c_ref[...]                                  # f32

    # Gates: one stacked bf16 weight, two MXU dots, f32 accumulation.
    gates = (jnp.dot(x, w_ref[pl.ds(0, LC), :], preferred_element_type=jnp.float32)
             + jnp.dot(h.astype(jnp.bfloat16), w_ref[pl.ds(LC, H), :],
                       preferred_element_type=jnp.float32)
             + b_ref[...])

    i = jax.nn.sigmoid(gates[:, 0 * H:1 * H])
    f = jax.nn.sigmoid(gates[:, 1 * H:2 * H])
    g = jnp.tanh(gates[:, 2 * H:3 * H])
    o = jax.nn.sigmoid(gates[:, 3 * H:4 * H])
    c_next = f * c + i * g
    h_next = o * jnp.tanh(c_next) + h               # residual: h' + h

    h_out_ref[...] = h_next                         # (B, H)  -> aliased sensors_h[sid]
    c_out_ref[...] = c_next                         # (B, H)  -> aliased sensors_c[sid]

    # Block-diagonal MLP: Linear -> ReLU -> Linear, hidden stays in VMEM,
    # lane-dense (B, L*C) output written straight into the aliased latent slab.
    h1 = jnp.dot(h_next.astype(jnp.bfloat16), w1_ref[...],
                 preferred_element_type=jnp.float32) + b1_ref[...]
    h1 = jnp.maximum(h1, 0.0)
    out_ref[...] = jnp.dot(h1.astype(jnp.bfloat16), w2_ref[...],
                           preferred_element_type=jnp.float32) + b2_ref[...]


# ----------------------------- parameters -----------------------------

def init_params(key, feature_channels, feature_size, num_sensors):
    """Torch-layout parameters (Linear weight = (out, in); LSTM gate order i,f,g,o)."""
    C = feature_channels
    L = feature_size[0] * feature_size[1]
    C2, C4, C8 = C // 2, C // 4, C // 8
    D = L * C2           # input_feature_vector
    H = L * C8           # lstm_hidden_size_1
    keys = jax.random.split(key, 9 + 4 * num_sensors)
    s = 0.1
    params = {
        'proj_w': s * jax.random.normal(keys[0], (C2, C), jnp.float32),
        'proj_b': s * jax.random.normal(keys[1], (C2,), jnp.float32),
        'mlp_w1': s * jax.random.normal(keys[2], (C4, C8), jnp.float32),
        'mlp_b1': s * jax.random.normal(keys[3], (C4,), jnp.float32),
        'mlp_w2': s * jax.random.normal(keys[4], (C, C4), jnp.float32),
        'mlp_b2': s * jax.random.normal(keys[5], (C,), jnp.float32),
        'init_sensor_h': jax.random.normal(keys[6], (num_sensors, 1, H), jnp.float32),
        'init_sensor_c': jax.random.normal(keys[7], (num_sensors, 1, H), jnp.float32),
        'latents':       jax.random.normal(keys[8], (num_sensors, 1, L, C), jnp.float32),
    }
    lstm = []
    for si in range(num_sensors):
        k0, k1, k2, k3 = keys[9 + 4 * si: 13 + 4 * si]
        lstm.append({
            'w_ih': s * jax.random.normal(k0, (4 * H, D), jnp.float32),   # torch layout
            'w_hh': s * jax.random.normal(k1, (4 * H, H), jnp.float32),
            'b_ih': s * jax.random.normal(k2, (4 * H,), jnp.float32),
            'b_hh': s * jax.random.normal(k3, (4 * H,), jnp.float32),
        })
    params['lstm'] = lstm
    return params


def prepare_kernel_params(params):
    """One-time conversion of torch-layout params into kernel-friendly layout.

    * Projection Linear folded exactly into the LSTM input weights.
    * Per-sensor [w_x_fused ; w_h] stacked into one (S, L*C+H, 4H) bf16 tensor;
      b_ih + b_hh (+ projection-bias term) pre-summed, kept f32.
    * MLP weights block-diagonalized (kron(I_L, W.T)) and cast to bf16 so the
      per-location MLP becomes two wide lane-dense matmuls on (B, H) data;
      biases tiled over L, kept f32.
    """
    S, _, L, C = params['latents'].shape
    C2 = params['proj_w'].shape[0]
    C4 = params['mlp_w1'].shape[0]
    wp_t = params['proj_w'].T            # (C, C2)
    bp = params['proj_b']                # (C2,)

    w_list, b_list = [], []
    for p in params['lstm']:
        wx = p['w_ih'].T                                  # (D, 4H), D = L*C2
        wh = p['w_hh'].T                                  # (H, 4H)
        G = wx.shape[1]
        wx3 = wx.reshape(L, C2, G)
        # Fold projection weight into the per-spatial-location weight blocks.
        w_x_fused = jnp.einsum('cp,lpg->lcg', wp_t, wx3).reshape(L * C, G)
        b = (p['b_ih'] + p['b_hh'] + bp @ wx3.sum(axis=0)).reshape(1, G)
        w_list.append(jnp.concatenate([w_x_fused, wh], axis=0))    # (L*C+H, 4H)
        b_list.append(b)

    eye_l = jnp.eye(L, dtype=jnp.float32)
    return {
        'w_stack': jnp.stack(w_list, axis=0).astype(jnp.bfloat16),   # (S, L*C+H, 4H)
        'b_stack': jnp.stack(b_list, axis=0),                        # (S, 1, 4H) f32
        'w1_bd': jnp.kron(eye_l, params['mlp_w1'].T).astype(jnp.bfloat16),  # (H, L*C4)
        'b1_t':  jnp.tile(params['mlp_b1'], L).reshape(1, L * C4),
        'w2_bd': jnp.kron(eye_l, params['mlp_w2'].T).astype(jnp.bfloat16),  # (L*C4, L*C)
        'b2_t':  jnp.tile(params['mlp_b2'], L).reshape(1, L * C),
        'init_sensor_h': params['init_sensor_h'],
        'init_sensor_c': params['init_sensor_c'],
        'latents': params['latents'],
    }


# ----------------------------- module forward -----------------------------

def _init_latents(p, batch_size):
    S, _, H = p['init_sensor_h'].shape
    _, _, L, C = p['latents'].shape
    return Latents(
        sensors_h=jnp.broadcast_to(p['init_sensor_h'], (S, batch_size, H)),
        sensors_c=jnp.broadcast_to(p['init_sensor_c'], (S, batch_size, H)),
        output=jnp.broadcast_to(p['latents'], (S, batch_size, L, C)),
    )


def center_point_lstm_forward(kparams, data, sensor_id, latents=None):
    S, _, L, C = kparams['latents'].shape
    H = kparams['init_sensor_h'].shape[-1]
    B = data.shape[0] if data is not None else latents.sensors_h.shape[1]
    if latents is None:
        latents = _init_latents(kparams, B)
    if data is None:
        data = latents.output[sensor_id]

    LC = L * C
    K = LC + H
    G = 4 * H
    LC4 = kparams['w1_bd'].shape[1]

    data_flat = data.reshape(B, LC)                      # row-major, free
    out_prev = latents.output.reshape(S, B, LC)          # row-major, free
    sid = jnp.asarray(sensor_id, dtype=jnp.int32).reshape(1)

    new_h, new_c, new_out = pl.pallas_call(
        _fused_step_kernel,
        out_shape=(
            jax.ShapeDtypeStruct((S, B, H), jnp.float32),
            jax.ShapeDtypeStruct((S, B, H), jnp.float32),
            jax.ShapeDtypeStruct((S, B, LC), jnp.float32),
        ),
        grid_spec=pltpu.PrefetchScalarGridSpec(
            num_scalar_prefetch=1,
            grid=(1,),
            in_specs=[
                pl.BlockSpec((B, LC), lambda i, s: (0, 0)),              # data_flat
                pl.BlockSpec((None, B, H), lambda i, s: (s[0], 0, 0)),   # sensors_h[sid]
                pl.BlockSpec((None, B, H), lambda i, s: (s[0], 0, 0)),   # sensors_c[sid]
                pl.BlockSpec((None, B, LC), lambda i, s: (s[0], 0, 0)),  # prev output (alias only)
                pl.BlockSpec((None, K, G), lambda i, s: (s[0], 0, 0)),   # stacked [wx;wh] (bf16)
                pl.BlockSpec((None, 1, G), lambda i, s: (s[0], 0, 0)),   # gate bias
                pl.BlockSpec((H, LC4), lambda i, s: (0, 0)),             # mlp w1 block-diag (bf16)
                pl.BlockSpec((1, LC4), lambda i, s: (0, 0)),
                pl.BlockSpec((LC4, LC), lambda i, s: (0, 0)),            # mlp w2 block-diag (bf16)
                pl.BlockSpec((1, LC), lambda i, s: (0, 0)),
            ],
            out_specs=(
                pl.BlockSpec((None, B, H), lambda i, s: (s[0], 0, 0)),
                pl.BlockSpec((None, B, H), lambda i, s: (s[0], 0, 0)),
                pl.BlockSpec((None, B, LC), lambda i, s: (s[0], 0, 0)),
            ),
        ),
        # In-place sensor-sliced latent updates: h/c/output buffers are aliased
        # (indices count the scalar-prefetch operand), so untouched sensor
        # slices pass through without any full-buffer copy.
        input_output_aliases={2: 0, 3: 1, 4: 2},
        compiler_params=pltpu.CompilerParams(dimension_semantics=("arbitrary",)),
    )(sid, data_flat, latents.sensors_h, latents.sensors_c, out_prev,
      kparams['w_stack'], kparams['b_stack'],
      kparams['w1_bd'], kparams['b1_t'], kparams['w2_bd'], kparams['b2_t'])

    new_latents = Latents(sensors_h=new_h, sensors_c=new_c,
                          output=new_out.reshape(S, B, L, C))
    # Raw row-major reshape (S, B, L, C) -> (B, S*L, C), exactly as in PyTorch.
    return new_out.reshape(B, S * L, C), new_latents


# ----------------------------- references -----------------------------

def reference_forward(params, data, sensor_id, latents=None):
    """Pure-JAX f32 reference with the original torch-layout parameters."""
    B = data.shape[0] if data is not None else latents.sensors_h.shape[1]
    if latents is None:
        latents = _init_latents(params, B)
    if data is None:
        data = latents.output[sensor_id]
    proj = data @ params['proj_w'].T + params['proj_b']
    x = proj.reshape(B, -1)
    h = latents.sensors_h[sensor_id]
    c = latents.sensors_c[sensor_id]
    p = params['lstm'][sensor_id]
    gates = x @ p['w_ih'].T + p['b_ih'] + h @ p['w_hh'].T + p['b_hh']
    i, f, g, o = jnp.split(gates, 4, axis=1)
    i, f, g, o = jax.nn.sigmoid(i), jax.nn.sigmoid(f), jnp.tanh(g), jax.nn.sigmoid(o)
    c_next = f * c + i * g
    h_next = o * jnp.tanh(c_next) + h
    L = latents.output.shape[2]
    so = h_next.reshape(B, L, -1)
    so = jnp.maximum(so @ params['mlp_w1'].T + params['mlp_b1'], 0.0) \
        @ params['mlp_w2'].T + params['mlp_b2']
    new_latents = Latents(
        sensors_h=latents.sensors_h.at[sensor_id].set(h_next),
        sensors_c=latents.sensors_c.at[sensor_id].set(c_next),
        output=latents.output.at[sensor_id].set(so),
    )
    S, B2, L2, C = new_latents.output.shape
    return new_latents.output.reshape(B2, S * L2, C), new_latents


def prepared_reference(kparams, data, sensor_id, latents=None):
    """Pure-JAX model of the prepared (bf16-quantized, fused) weights.

    Isolates kernel-implementation correctness from bf16 quantization error.
    """
    S, _, L, C = kparams['latents'].shape
    B = data.shape[0]
    if latents is None:
        latents = _init_latents(kparams, B)
    LC = L * C

    def bf(a):
        return a.astype(jnp.bfloat16).astype(jnp.float32)

    x = data.reshape(B, LC)
    h = latents.sensors_h[sensor_id]
    c = latents.sensors_c[sensor_id]
    w = kparams['w_stack'][sensor_id].astype(jnp.float32)
    b = kparams['b_stack'][sensor_id]
    gates = bf(x) @ w[:LC] + bf(h) @ w[LC:] + b
    i, f, g, o = jnp.split(gates, 4, axis=1)
    i, f, g, o = jax.nn.sigmoid(i), jax.nn.sigmoid(f), jnp.tanh(g), jax.nn.sigmoid(o)
    c_next = f * c + i * g
    h_next = o * jnp.tanh(c_next) + h
    h1 = jnp.maximum(bf(h_next) @ kparams['w1_bd'].astype(jnp.float32)
                     + kparams['b1_t'], 0.0)
    so = (bf(h1) @ kparams['w2_bd'].astype(jnp.float32)
          + kparams['b2_t']).reshape(B, L, C)
    return so, h_next, c_next


# ----------------------------- main -----------------------------

if __name__ == "__main__":
    # Small deterministic configuration.
    feature_channels = 32       # C  (C//2=16, C//4=8, C//8=4)
    feature_size = (4, 4)       # L = 16 -> D = 256, H = 64, 4H = 256, L*C = 512
    num_sensors = 2
    B = 2
    L = feature_size[0] * feature_size[1]
    H = L * feature_channels // 8

    key = jax.random.PRNGKey(0)
    kparam, kdata = jax.random.split(key)
    params = init_params(kparam, feature_channels, feature_size, num_sensors)
    kparams = prepare_kernel_params(params)          # one-time weight prep (bf16)
    data = jax.random.normal(kdata, (B, L, feature_channels), dtype=jnp.float32)

    fwd = jax.jit(center_point_lstm_forward)
    out, new_latents = fwd(kparams, data, 1)
    out = jax.block_until_ready(out)
    assert out.shape == (B, num_sensors * L, feature_channels)

    # (1) Tight check vs a pure-JAX model of the prepared (bf16) weights:
    #     catches any kernel indexing / fusion / aliasing bug.
    q_so, q_h, q_c = prepared_reference(kparams, data, 1)
    assert jnp.allclose(new_latents.output[1], q_so, rtol=1e-3, atol=1e-3), "MLP output mismatch"
    assert jnp.allclose(new_latents.sensors_h[1], q_h, rtol=1e-3, atol=1e-3), "hidden-state mismatch"
    assert jnp.allclose(new_latents.sensors_c[1], q_c, rtol=1e-3, atol=1e-3), "cell-state mismatch"

    # (2) Semantics check vs the f32 torch-layout reference; tolerance covers
    #     the intentional bf16 weight quantization.
    ref_out, ref_latents = reference_forward(params, data, 1)
    assert jnp.allclose(out, ref_out, rtol=1e-1, atol=5e-2), "output mismatch vs f32 reference"
    assert jnp.allclose(new_latents.sensors_h[1], ref_latents.sensors_h[1],
                        rtol=1e-1, atol=5e-2), "hidden mismatch vs f32 reference"
    assert jnp.allclose(new_latents.sensors_c[1], ref_latents.sensors_c[1],
                        rtol=1e-1, atol=5e-2), "cell mismatch vs f32 reference"

    # (3) Untouched sensor (id 0) must pass through the aliased buffers bitwise.
    assert jnp.array_equal(new_latents.sensors_h[0],
                           jnp.broadcast_to(params['init_sensor_h'][0], (B, H)))
    assert jnp.array_equal(new_latents.sensors_c[0],
                           jnp.broadcast_to(params['init_sensor_c'][0], (B, H)))
    assert jnp.array_equal(new_latents.output[0],
                           jnp.broadcast_to(params['latents'][0], (B, L, feature_channels)))

    print("KERNEL_OK")
</pallas_src>

<mosaic_0001>
module attributes {stable_mosaic.version = 11 : i64} {
  func.func @_fused_step_kernel(%arg0: i32, %arg1: memref<1xi32, #tpu.memory_space<smem>>, %arg2: memref<2x512xf32, #tpu.memory_space<vmem>>, %arg3: memref<1x2x64xf32, #tpu.memory_space<vmem>>, %arg4: memref<1x2x64xf32, #tpu.memory_space<vmem>>, %arg5: memref<1x2x512xf32, #tpu.memory_space<vmem>>, %arg6: memref<1x576x256xbf16, #tpu.memory_space<vmem>>, %arg7: memref<1x1x256xf32, #tpu.memory_space<vmem>>, %arg8: memref<64x128xbf16, #tpu.memory_space<vmem>>, %arg9: memref<1x128xf32, #tpu.memory_space<vmem>>, %arg10: memref<128x512xbf16, #tpu.memory_space<vmem>>, %arg11: memref<1x512xf32, #tpu.memory_space<vmem>>, %arg12: memref<1x2x64xf32, #tpu.memory_space<vmem>>, %arg13: memref<1x2x64xf32, #tpu.memory_space<vmem>>, %arg14: memref<1x2x512xf32, #tpu.memory_space<vmem>>) attributes {dimension_semantics = [#tpu.dimension_semantics<arbitrary>], iteration_bounds = array<i64: 1>, scalar_prefetch = 1 : i64, scratch_operands = 0 : i64, tpu.core_type = #tpu.core_type<tc>, window_params = [{pipeline_mode = #tpu.pipeline_mode<synchronous>, transform_indices = @transform_0, window_bounds = array<i64: 2, 512>}, {transform_indices = @transform_1, window_bounds = array<i64: 1, 2, 64>}, {transform_indices = @transform_2, window_bounds = array<i64: 1, 2, 64>}, {transform_indices = @transform_3, window_bounds = array<i64: 1, 2, 512>}, {transform_indices = @transform_4, window_bounds = array<i64: 1, 576, 256>}, {transform_indices = @transform_5, window_bounds = array<i64: 1, 1, 256>}, {pipeline_mode = #tpu.pipeline_mode<synchronous>, transform_indices = @transform_6, window_bounds = array<i64: 64, 128>}, {pipeline_mode = #tpu.pipeline_mode<synchronous>, transform_indices = @transform_7, window_bounds = array<i64: 1, 128>}, {pipeline_mode = #tpu.pipeline_mode<synchronous>, transform_indices = @transform_8, window_bounds = array<i64: 128, 512>}, {pipeline_mode = #tpu.pipeline_mode<synchronous>, transform_indices = @transform_9, window_bounds = array<i64: 1, 512>}, {transform_indices = @transform_10, window_bounds = array<i64: 1, 2, 64>}, {transform_indices = @transform_11, window_bounds = array<i64: 1, 2, 64>}, {transform_indices = @transform_12, window_bounds = array<i64: 1, 2, 512>}]} {
    %c0 = arith.constant 0 : index
    %c0_0 = arith.constant 0 : index
    %0 = vector.load %arg2[%c0, %c0_0] : memref<2x512xf32, #tpu.memory_space<vmem>>, vector<2x512xf32>
    %1 = arith.truncf %0 : vector<2x512xf32> to vector<2x512xbf16>
    %c0_1 = arith.constant 0 : index
    %c0_2 = arith.constant 0 : index
    %c0_3 = arith.constant 0 : index
    %2 = vector.load %arg3[%c0_1, %c0_2, %c0_3] : memref<1x2x64xf32, #tpu.memory_space<vmem>>, vector<1x2x64xf32>
    %3 = vector.shape_cast %2 : vector<1x2x64xf32> to vector<2x64xf32>
    %c0_4 = arith.constant 0 : index
    %c0_5 = arith.constant 0 : index
    %c0_6 = arith.constant 0 : index
    %4 = vector.load %arg4[%c0_4, %c0_5, %c0_6] : memref<1x2x64xf32, #tpu.memory_space<vmem>>, vector<1x2x64xf32>
    %5 = vector.shape_cast %4 : vector<1x2x64xf32> to vector<2x64xf32>
    %c0_7 = arith.constant 0 : index
    %c0_8 = arith.constant 0 : index
    %c0_9 = arith.constant 0 : index
    %6 = vector.load %arg6[%c0_7, %c0_8, %c0_9] : memref<1x576x256xbf16, #tpu.memory_space<vmem>>, vector<1x512x256xbf16>
    %7 = vector.shape_cast %6 : vector<1x512x256xbf16> to vector<512x256xbf16>
    %cst = arith.constant dense<0.000000e+00> : vector<2x256xf32>
    %8 = tpu.matmul %1, %7, %cst {dimension_numbers = #tpu.dot_dimension_numbers<[1], [0], [0], [1], [0, 0, 1, 1], [], []>} : vector<2x512xbf16>, vector<512x256xbf16>, vector<2x256xf32> -> vector<2x256xf32>
    %9 = arith.truncf %3 : vector<2x64xf32> to vector<2x64xbf16>
    %c0_10 = arith.constant 0 : index
    %c512 = arith.constant 512 : index
    %c0_11 = arith.constant 0 : index
    %10 = vector.load %arg6[%c0_10, %c512, %c0_11] : memref<1x576x256xbf16, #tpu.memory_space<vmem>>, vector<1x64x256xbf16>
    %11 = vector.shape_cast %10 : vector<1x64x256xbf16> to vector<64x256xbf16>
    %cst_12 = arith.constant dense<0.000000e+00> : vector<2x256xf32>
    %12 = tpu.matmul %9, %11, %cst_12 {dimension_numbers = #tpu.dot_dimension_numbers<[1], [0], [0], [1], [0, 0, 1, 1], [], []>} : vector<2x64xbf16>, vector<64x256xbf16>, vector<2x256xf32> -> vector<2x256xf32>
    %13 = arith.addf %8, %12 : vector<2x256xf32>
    %c0_13 = arith.constant 0 : index
    %c0_14 = arith.constant 0 : index
    %c0_15 = arith.constant 0 : index
    %14 = vector.load %arg7[%c0_13, %c0_14, %c0_15] : memref<1x1x256xf32, #tpu.memory_space<vmem>>, vector<1x1x256xf32>
    %15 = vector.shape_cast %14 : vector<1x1x256xf32> to vector<1x256xf32>
    %16 = vector.broadcast %15 : vector<1x256xf32> to vector<2x256xf32>
    %17 = arith.addf %13, %16 : vector<2x256xf32>
    %18 = vector.extract_strided_slice %17 {offsets = [0, 0], sizes = [2, 64], strides = [1, 1]} : vector<2x256xf32> to vector<2x64xf32>
    %19 = arith.negf %18 : vector<2x64xf32>
    %20 = math.exp %19 : vector<2x64xf32>
    %cst_16 = arith.constant 1.000000e+00 : f32
    %21 = vector.broadcast %cst_16 : f32 to vector<2x64xf32>
    %22 = arith.addf %21, %20 : vector<2x64xf32>
    %23 = arith.divf %21, %22 : vector<2x64xf32>
    %24 = vector.extract_strided_slice %17 {offsets = [0, 64], sizes = [2, 64], strides = [1, 1]} : vector<2x256xf32> to vector<2x64xf32>
    %25 = arith.negf %24 : vector<2x64xf32>
    %26 = math.exp %25 : vector<2x64xf32>
    %cst_17 = arith.constant 1.000000e+00 : f32
    %27 = vector.broadcast %cst_17 : f32 to vector<2x64xf32>
    %28 = arith.addf %27, %26 : vector<2x64xf32>
    %29 = arith.divf %27, %28 : vector<2x64xf32>
    %30 = vector.extract_strided_slice %17 {offsets = [0, 128], sizes = [2, 64], strides = [1, 1]} : vector<2x256xf32> to vector<2x64xf32>
    %31 = math.tanh %30 : vector<2x64xf32>
    %32 = vector.extract_strided_slice %17 {offsets = [0, 192], sizes = [2, 64], strides = [1, 1]} : vector<2x256xf32> to vector<2x64xf32>
    %33 = arith.negf %32 : vector<2x64xf32>
    %34 = math.exp %33 : vector<2x64xf32>
    %cst_18 = arith.constant 1.000000e+00 : f32
    %35 = vector.broadcast %cst_18 : f32 to vector<2x64xf32>
    %36 = arith.addf %35, %34 : vector<2x64xf32>
    %37 = arith.divf %35, %36 : vector<2x64xf32>
    %38 = arith.mulf %29, %5 : vector<2x64xf32>
    %39 = arith.mulf %23, %31 : vector<2x64xf32>
    %40 = arith.addf %38, %39 : vector<2x64xf32>
    %41 = math.tanh %40 : vector<2x64xf32>
    %42 = arith.mulf %37, %41 : vector<2x64xf32>
    %43 = arith.addf %42, %3 : vector<2x64xf32>
    %c0_19 = arith.constant 0 : index
    %c0_20 = arith.constant 0 : index
    %c0_21 = arith.constant 0 : index
    %44 = vector.load %arg12[%c0_19, %c0_20, %c0_21] : memref<1x2x64xf32, #tpu.memory_space<vmem>>, vector<1x2x64xf32>
    %45 = vector.shape_cast %44 : vector<1x2x64xf32> to vector<2x64xf32>
    %46 = vector.shape_cast %43 : vector<2x64xf32> to vector<1x2x64xf32>
    tpu.vector_store %arg12[%c0_19, %c0_20, %c0_21], %46 {strides = array<i32>} : memref<1x2x64xf32, #tpu.memory_space<vmem>>, vector<1x2x64xf32>,
    %c0_22 = arith.constant 0 : index
    %c0_23 = arith.constant 0 : index
    %c0_24 = arith.constant 0 : index
    %47 = vector.load %arg13[%c0_22, %c0_23, %c0_24] : memref<1x2x64xf32, #tpu.memory_space<vmem>>, vector<1x2x64xf32>
    %48 = vector.shape_cast %47 : vector<1x2x64xf32> to vector<2x64xf32>
    %49 = vector.shape_cast %40 : vector<2x64xf32> to vector<1x2x64xf32>
    tpu.vector_store %arg13[%c0_22, %c0_23, %c0_24], %49 {strides = array<i32>} : memref<1x2x64xf32, #tpu.memory_space<vmem>>, vector<1x2x64xf32>,
    %50 = arith.truncf %43 : vector<2x64xf32> to vector<2x64xbf16>
    %c0_25 = arith.constant 0 : index
    %c0_26 = arith.constant 0 : index
    %51 = vector.load %arg8[%c0_25, %c0_26] : memref<64x128xbf16, #tpu.memory_space<vmem>>, vector<64x128xbf16>
    %cst_27 = arith.constant dense<0.000000e+00> : vector<2x128xf32>
    %52 = tpu.matmul %50, %51, %cst_27 {dimension_numbers = #tpu.dot_dimension_numbers<[1], [0], [0], [1], [0, 0, 1, 1], [], []>} : vector<2x64xbf16>, vector<64x128xbf16>, vector<2x128xf32> -> vector<2x128xf32>
    %c0_28 = arith.constant 0 : index
    %c0_29 = arith.constant 0 : index
    %53 = vector.load %arg9[%c0_28, %c0_29] : memref<1x128xf32, #tpu.memory_space<vmem>>, vector<1x128xf32>
    %54 = vector.broadcast %53 : vector<1x128xf32> to vector<2x128xf32>
    %55 = arith.addf %52, %54 : vector<2x128xf32>
    %cst_30 = arith.constant 0.000000e+00 : f32
    %56 = vector.broadcast %cst_30 : f32 to vector<2x128xf32>
    %57 = arith.maximumf %55, %56 : vector<2x128xf32>
    %58 = arith.truncf %57 : vector<2x128xf32> to vector<2x128xbf16>
    %c0_31 = arith.constant 0 : index
    %c0_32 = arith.constant 0 : index
    %59 = vector.load %arg10[%c0_31, %c0_32] : memref<128x512xbf16, #tpu.memory_space<vmem>>, vector<128x512xbf16>
    %cst_33 = arith.constant dense<0.000000e+00> : vector<2x512xf32>
    %60 = tpu.matmul %58, %59, %cst_33 {dimension_numbers = #tpu.dot_dimension_numbers<[1], [0], [0], [1], [0, 0, 1, 1], [], []>} : vector<2x128xbf16>, vector<128x512xbf16>, vector<2x512xf32> -> vector<2x512xf32>
    %c0_34 = arith.constant 0 : index
    %c0_35 = arith.constant 0 : index
    %61 = vector.load %arg11[%c0_34, %c0_35] : memref<1x512xf32, #tpu.memory_space<vmem>>, vector<1x512xf32>
    %62 = vector.broadcast %61 : vector<1x512xf32> to vector<2x512xf32>
    %63 = arith.addf %60, %62 : vector<2x512xf32>
    %c0_36 = arith.constant 0 : index
    %c0_37 = arith.constant 0 : index
    %c0_38 = arith.constant 0 : index
    %64 = vector.load %arg14[%c0_36, %c0_37, %c0_38] : memref<1x2x512xf32, #tpu.memory_space<vmem>>, vector<1x2x512xf32>
    %65 = vector.shape_cast %64 : vector<1x2x512xf32> to vector<2x512xf32>
    %66 = vector.shape_cast %63 : vector<2x512xf32> to vector<1x2x512xf32>
    tpu.vector_store %arg14[%c0_36, %c0_37, %c0_38], %66 {strides = array<i32>} : memref<1x2x512xf32, #tpu.memory_space<vmem>>, vector<1x2x512xf32>,
    return
  }
  func.func @transform_0(%arg0: i32, %arg1: memref<1xi32, #tpu.memory_space<smem>>) -> (i32, i32) {
    %c0_i32 = arith.constant 0 : i32
    %c0_i32_0 = arith.constant 0 : i32
    %c0_i32_1 = arith.constant 0 : i32
    return %c0_i32, %c0_i32_0 : i32, i32
  }
  func.func @transform_1(%arg0: i32, %arg1: memref<1xi32, #tpu.memory_space<smem>>) -> (i32, i32, i32) {
    %c0 = arith.constant 0 : index
    %0 = memref.load %arg1[%c0] : memref<1xi32, #tpu.memory_space<smem>>
    %c0_i32 = arith.constant 0 : i32
    %c0_i32_0 = arith.constant 0 : i32
    %c0_i32_1 = arith.constant 0 : i32
    return %0, %c0_i32, %c0_i32_0 : i32, i32, i32
  }
  func.func @transform_2(%arg0: i32, %arg1: memref<1xi32, #tpu.memory_space<smem>>) -> (i32, i32, i32) {
    %c0 = arith.constant 0 : index
    %0 = memref.load %arg1[%c0] : memref<1xi32, #tpu.memory_space<smem>>
    %c0_i32 = arith.constant 0 : i32
    %c0_i32_0 = arith.constant 0 : i32
    %c0_i32_1 = arith.constant 0 : i32
    return %0, %c0_i32, %c0_i32_0 : i32, i32, i32
  }
  func.func @transform_3(%arg0: i32, %arg1: memref<1xi32, #tpu.memory_space<smem>>) -> (i32, i32, i32) {
    %c0 = arith.constant 0 : index
    %0 = memref.load %arg1[%c0] : memref<1xi32, #tpu.memory_space<smem>>
    %c0_i32 = arith.constant 0 : i32
    %c0_i32_0 = arith.constant 0 : i32
    %c0_i32_1 = arith.constant 0 : i32
    return %0, %c0_i32, %c0_i32_0 : i32, i32, i32
  }
  func.func @transform_4(%arg0: i32, %arg1: memref<1xi32, #tpu.memory_space<smem>>) -> (i32, i32, i32) {
    %c0 = arith.constant 0 : index
    %0 = memref.load %arg1[%c0] : memref<1xi32, #tpu.memory_space<smem>>
    %c0_i32 = arith.constant 0 : i32
    %c0_i32_0 = arith.constant 0 : i32
    %c0_i32_1 = arith.constant 0 : i32
    return %0, %c0_i32, %c0_i32_0 : i32, i32, i32
  }
  func.func @transform_5(%arg0: i32, %arg1: memref<1xi32, #tpu.memory_space<smem>>) -> (i32, i32, i32) {
    %c0 = arith.constant 0 : index
    %0 = memref.load %arg1[%c0] : memref<1xi32, #tpu.memory_space<smem>>
    %c0_i32 = arith.constant 0 : i32
    %c0_i32_0 = arith.constant 0 : i32
    %c0_i32_1 = arith.constant 0 : i32
    return %0, %c0_i32, %c0_i32_0 : i32, i32, i32
  }
  func.func @transform_6(%arg0: i32, %arg1: memref<1xi32, #tpu.memory_space<smem>>) -> (i32, i32) {
    %c0_i32 = arith.constant 0 : i32
    %c0_i32_0 = arith.constant 0 : i32
    %c0_i32_1 = arith.constant 0 : i32
    return %c0_i32, %c0_i32_0 : i32, i32
  }
  func.func @transform_7(%arg0: i32, %arg1: memref<1xi32, #tpu.memory_space<smem>>) -> (i32, i32) {
    %c0_i32 = arith.constant 0 : i32
    %c0_i32_0 = arith.constant 0 : i32
    %c0_i32_1 = arith.constant 0 : i32
    return %c0_i32, %c0_i32_0 : i32, i32
  }
  func.func @transform_8(%arg0: i32, %arg1: memref<1xi32, #tpu.memory_space<smem>>) -> (i32, i32) {
    %c0_i32 = arith.constant 0 : i32
    %c0_i32_0 = arith.constant 0 : i32
    %c0_i32_1 = arith.constant 0 : i32
    return %c0_i32, %c0_i32_0 : i32, i32
  }
  func.func @transform_9(%arg0: i32, %arg1: memref<1xi32, #tpu.memory_space<smem>>) -> (i32, i32) {
    %c0_i32 = arith.constant 0 : i32
    %c0_i32_0 = arith.constant 0 : i32
    %c0_i32_1 = arith.constant 0 : i32
    return %c0_i32, %c0_i32_0 : i32, i32
  }
  func.func @transform_10(%arg0: i32, %arg1: memref<1xi32, #tpu.memory_space<smem>>) -> (i32, i32, i32) {
    %c0 = arith.constant 0 : index
    %0 = memref.load %arg1[%c0] : memref<1xi32, #tpu.memory_space<smem>>
    %c0_i32 = arith.constant 0 : i32
    %c0_i32_0 = arith.constant 0 : i32
    %c0_i32_1 = arith.constant 0 : i32
    return %0, %c0_i32, %c0_i32_0 : i32, i32, i32
  }
  func.func @transform_11(%arg0: i32, %arg1: memref<1xi32, #tpu.memory_space<smem>>) -> (i32, i32, i32) {
    %c0 = arith.constant 0 : index
    %0 = memref.load %arg1[%c0] : memref<1xi32, #tpu.memory_space<smem>>
    %c0_i32 = arith.constant 0 : i32
    %c0_i32_0 = arith.constant 0 : i32
    %c0_i32_1 = arith.constant 0 : i32
    return %0, %c0_i32, %c0_i32_0 : i32, i32, i32
  }
  func.func @transform_12(%arg0: i32, %arg1: memref<1xi32, #tpu.memory_space<smem>>) -> (i32, i32, i32) {
    %c0 = arith.constant 0 : index
    %0 = memref.load %arg1[%c0] : memref<1xi32, #tpu.memory_space<smem>>
    %c0_i32 = arith.constant 0 : i32
    %c0_i32_0 = arith.constant 0 : i32
    %c0_i32_1 = arith.constant 0 : i32
    return %0, %c0_i32, %c0_i32_0 : i32, i32, i32
  }
}

</mosaic_0001>

<llo_original>
// kernel: center_point_lstm_forward.1
$region0: #{center_point_lstm_forward.1}
  #allocation0 [shape = 'u32[]', space=smem, size = 0x4, offset = 0x4, fixed_abs, tag = 'smem constant byte address 0x4 - core index']
  #allocation1 [shape = 'u32[144,128]{1,0:T(1,128)}', space=vmem, size = 0x12000, scoped, tag = 'internal scratch']
  #allocation2 [shape = 's32[1]{0}', space=sflag, size = 0x4, scoped, tag = 'scoped memory for center_point_lstm_forward.1']
  #allocation3 [shape = 's32[1]{0:T(128)S(6)}', space=smem, size = 0x200, scoped, tag = 'prefetched SMEM operand 0']
  %s0 = inlined_call_operand.<no memory space> [shape: s32[1], index: 0, kind: input, shape index: {}]
  %s1 = inlined_call_operand.vmem [shape: f32[2,512], index: 1, kind: input, shape index: {}]
  %s2 = inlined_call_operand.vmem [shape: f32[2,2,64], index: 2, kind: input, shape index: {}, may-alias: {2,11}]
  %s3 = inlined_call_operand.vmem [shape: f32[2,2,64], index: 3, kind: input, shape index: {}, may-alias: {3,12}]
  %s4 = inlined_call_operand.vmem [shape: f32[2,2,512], index: 4, kind: input, shape index: {}, may-alias: {4,13}]
  %s5 = inlined_call_operand.hbm [shape: bf16[2,576,256], index: 5, kind: input, shape index: {}]
  %s6 = inlined_call_operand.vmem [shape: f32[2,1,256], index: 6, kind: input, shape index: {}]
  %s7 = inlined_call_operand.vmem [shape: bf16[64,128], index: 7, kind: input, shape index: {}]
  %s8 = inlined_call_operand.vmem [shape: f32[1,128], index: 8, kind: input, shape index: {}]
  %s9 = inlined_call_operand.hbm [shape: bf16[128,512], index: 9, kind: input, shape index: {}]
  %s10 = inlined_call_operand.vmem [shape: f32[1,512], index: 10, kind: input, shape index: {}]
  %s11 = inlined_call_operand.vmem [shape: f32[2,2,64], index: 11, kind: output, shape index: {0}, may-alias: {2,11}]
  %s12 = inlined_call_operand.vmem [shape: f32[2,2,64], index: 12, kind: output, shape index: {1}, may-alias: {3,12}]
  %s13 = inlined_call_operand.vmem [shape: f32[2,2,512], index: 13, kind: output, shape index: {2}, may-alias: {4,13}]
  %14 = xla_tuple %s11, %s12, %s13
  %s15 = sld [smem:[#allocation0]]
  $region74: #{center_point_lstm_forward.1} parent=0
    _
  %s17 = ssub.s32 1, %s15
  %s18 = scalar_select 0, %s17, %s15
  %19 = sst [smem:[#allocation3]] %s0
  $region1: #{center_point_lstm_forward.1} parent=0
    #allocation4 [shape = 'u8[294912]{0}', space=vmem, size = 0x48000, scoped, tag = 'input window, operand 5, single buffered']
    #allocation5 [shape = 's32[1]{0}', space=sflag, size = 0x4, scoped, tag = 'scoped memory for center_point_lstm_forward.1']
    #allocation6 [shape = 'u8[131072]{0}', space=vmem, size = 0x20000, scoped, tag = 'input window, operand 9, single buffered']
    #allocation7 [shape = 's32[1]{0}', space=sflag, size = 0x4, scoped, tag = 'scoped memory for center_point_lstm_forward.1']
    %20 = vsyncpa [#allocation5], 0
    %21 = vsyncpa [#allocation7], 0
    // Predicated region
    $region2: #{center_point_lstm_forward.1} parent=1 // pred_check
      _
    $region3: #{center_point_lstm_forward.1} parent=1 // pred_check_branch
      %23 = sbr.rel (0) target = $region5
    $region4: #{center_point_lstm_forward.1} parent=1 // pred_region
      _
    $region5: #{center_point_lstm_forward.1} parent=1 // pred_fallthru
      _
    // Predicated region
    $region6: #{center_point_lstm_forward.1} parent=1 // pred_check
      _
    $region7: #{center_point_lstm_forward.1} parent=1 // pred_check_branch
      %25 = sbr.rel (0) target = $region9
    $region8: #{center_point_lstm_forward.1} parent=1 // pred_region
      %s26 = sld [smem:[#allocation3]]
      %p27 = scmp.lt.s32.totalorder %s26, 1
      %s28 = scalar_select %p27, %s26, 1
      %s29 = smul.addr %s28, 2
      %s30 = scalar_lea.vmem %s2, %s29
      %s31 = sld [smem:[#allocation3]]
    $region9: #{center_point_lstm_forward.1} parent=1 // pred_fallthru
      _
    // Predicated region
    $region10: #{center_point_lstm_forward.1} parent=1 // pred_check
      _
    $region11: #{center_point_lstm_forward.1} parent=1 // pred_check_branch
      %33 = sbr.rel (0) target = $region13
    $region12: #{center_point_lstm_forward.1} parent=1 // pred_region
      %s34 = sld [smem:[#allocation3]]
      %p35 = scmp.lt.s32.totalorder %s34, 1
      %s36 = scalar_select %p35, %s34, 1
      %s37 = smul.addr %s36, 2
      %s38 = scalar_lea.vmem %s3, %s37
      %s39 = sld [smem:[#allocation3]]
    $region13: #{center_point_lstm_forward.1} parent=1 // pred_fallthru
      _
    // Predicated region
    $region14: #{center_point_lstm_forward.1} parent=1 // pred_check
      _
    $region15: #{center_point_lstm_forward.1} parent=1 // pred_check_branch
      %41 = sbr.rel (0) target = $region17
    $region16: #{center_point_lstm_forward.1} parent=1 // pred_region
      %s42 = sld [smem:[#allocation3]]
      %p43 = scmp.lt.s32.totalorder %s42, 1
      %s44 = scalar_select %p43, %s42, 1
      %s45 = smul.addr %s44, 4
      %s46 = smul.addr %s45, 2
      %s47 = scalar_lea.vmem %s4, %s46
      %s48 = sld [smem:[#allocation3]]
    $region17: #{center_point_lstm_forward.1} parent=1 // pred_fallthru
      _
    // Predicated region
    $region18: #{center_point_lstm_forward.1} parent=1 // pred_check
      _
    $region19: #{center_point_lstm_forward.1} parent=1 // pred_check_branch
      %50 = sbr.rel (0) target = $region21
    $region20: #{center_point_lstm_forward.1} parent=1 // pred_region
      %s51 = sld [smem:[#allocation3]]
      %s53 = ssub.s32 9216, 9216
      %54 = vsyncadd [#allocation5], %s53
      %s55 = smul.addr %s51, 144
      %s56 = smul.addr %s55, 64
      %s57 = scalar_lea.hbm %s5, %s56
      %s58 = sshll.u32 [#allocation4], 4
      %s59 = int_to_ptr.vmem [resolvable:$true] %s58
      %64 = dma.hbm_to_vmem [thread:$0]  %s57, 9216, %s59, [#allocation5], 128, 128, 8
    $region21: #{center_point_lstm_forward.1} parent=1 // pred_fallthru
      _
    // Predicated region
    $region22: #{center_point_lstm_forward.1} parent=1 // pred_check
      _
    $region23: #{center_point_lstm_forward.1} parent=1 // pred_check_branch
      %66 = sbr.rel (0) target = $region25
    $region24: #{center_point_lstm_forward.1} parent=1 // pred_region
      %s67 = sld [smem:[#allocation3]]
      %p68 = scmp.lt.s32.totalorder %s67, 1
      %s69 = scalar_select %p68, %s67, 1
      %s70 = smul.addr %s69, 2
      %s71 = scalar_lea.vmem %s6, %s70
      %s72 = sld [smem:[#allocation3]]
    $region25: #{center_point_lstm_forward.1} parent=1 // pred_fallthru
      _
    // Predicated region
    $region26: #{center_point_lstm_forward.1} parent=1 // pred_check
      _
    $region27: #{center_point_lstm_forward.1} parent=1 // pred_check_branch
      %74 = sbr.rel (0) target = $region29
    $region28: #{center_point_lstm_forward.1} parent=1 // pred_region
      _
    $region29: #{center_point_lstm_forward.1} parent=1 // pred_fallthru
      _
    // Predicated region
    $region30: #{center_point_lstm_forward.1} parent=1 // pred_check
      _
    $region31: #{center_point_lstm_forward.1} parent=1 // pred_check_branch
      %76 = sbr.rel (0) target = $region33
    $region32: #{center_point_lstm_forward.1} parent=1 // pred_region
      _
    $region33: #{center_point_lstm_forward.1} parent=1 // pred_fallthru
      _
    // Predicated region
    $region34: #{center_point_lstm_forward.1} parent=1 // pred_check
      _
    $region35: #{center_point_lstm_forward.1} parent=1 // pred_check_branch
      %78 = sbr.rel (0) target = $region37
    $region36: #{center_point_lstm_forward.1} parent=1 // pred_region
      %s80 = ssub.s32 4096, 4096
      %81 = vsyncadd [#allocation7], %s80
      %s82 = sshll.u32 [#allocation6], 4
      %s83 = int_to_ptr.vmem [resolvable:$true] %s82
      %88 = dma.hbm_to_vmem [thread:$0]  %s9, 4096, %s83, [#allocation7], 256, 256, 16
    $region37: #{center_point_lstm_forward.1} parent=1 // pred_fallthru
      _
    // Predicated region
    $region38: #{center_point_lstm_forward.1} parent=1 // pred_check
      _
    $region39: #{center_point_lstm_forward.1} parent=1 // pred_check_branch
      %90 = sbr.rel (0) target = $region41
    $region40: #{center_point_lstm_forward.1} parent=1 // pred_region
      _
    $region41: #{center_point_lstm_forward.1} parent=1 // pred_fallthru
      _
    // Predicated region
    $region42: #{center_point_lstm_forward.1} parent=1 // pred_check
      _
    $region43: #{center_point_lstm_forward.1} parent=1 // pred_check_branch
      %92 = sbr.rel (0) target = $region45
    $region44: #{center_point_lstm_forward.1} parent=1 // pred_region
      %93 = dma.done [#allocation5], 9216
    $region45: #{center_point_lstm_forward.1} parent=1 // pred_fallthru
      _
    // Predicated region
    $region46: #{center_point_lstm_forward.1} parent=1 // pred_check
      _
    $region47: #{center_point_lstm_forward.1} parent=1 // pred_check_branch
      %95 = sbr.rel (0) target = $region49
    $region48: #{center_point_lstm_forward.1} parent=1 // pred_region
      %96 = dma.done [#allocation7], 4096
    $region49: #{center_point_lstm_forward.1} parent=1 // pred_fallthru
      _
    %s97 = sld [smem:[#allocation3]]
    %p98 = scmp.lt.s32.totalorder %s97, 1
    %s99 = scalar_select %p98, %s97, 1
    %s100 = smul.addr %s99, 2
    %s101 = scalar_lea.vmem %s2, %s100
    %s102 = sld [smem:[#allocation3]]
    %p103 = scmp.lt.s32.totalorder %s102, 1
    %s104 = scalar_select %p103, %s102, 1
    %s105 = smul.addr %s104, 2
    %s106 = scalar_lea.vmem %s3, %s105
    %s107 = sld [smem:[#allocation3]]
    %p108 = scmp.lt.s32.totalorder %s107, 1
    %s109 = scalar_select %p108, %s107, 1
    %s110 = smul.addr %s109, 4
    %s111 = smul.addr %s110, 2
    %s112 = scalar_lea.vmem %s4, %s111
    %s113 = sld [smem:[#allocation3]]
    %p114 = scmp.lt.s32.totalorder %s113, 1
    %s115 = scalar_select %p114, %s113, 1
    %s116 = smul.addr %s115, 2
    %s117 = scalar_lea.vmem %s6, %s116
    %s118 = sld [smem:[#allocation3]]
    %p119 = scmp.lt.s32.totalorder %s118, 1
    %s120 = scalar_select %p119, %s118, 1
    %s121 = smul.addr %s120, 2
    %s122 = scalar_lea.vmem %s11, %s121
    %s123 = sld [smem:[#allocation3]]
    %p124 = scmp.lt.s32.totalorder %s123, 1
    %s125 = scalar_select %p124, %s123, 1
    %s126 = smul.addr %s125, 2
    %s127 = scalar_lea.vmem %s12, %s126
    %s128 = sld [smem:[#allocation3]]
    %p129 = scmp.lt.s32.totalorder %s128, 1
    %s130 = scalar_select %p129, %s128, 1
    %s131 = smul.addr %s130, 4
    %s132 = smul.addr %s131, 2
    %s133 = scalar_lea.vmem %s13, %s132
    %s134 = sld [smem:[#allocation3]]
    %p135 = scmp.lt.s32.totalorder %s134, 1
    %s136 = scalar_select %p135, %s134, 1
    %s137 = smul.addr %s136, 2
    %s138 = scalar_lea.vmem %s2, %s137
    %s139 = sld [smem:[#allocation3]]
    %s140 = sld [smem:[#allocation3]]
    %p141 = scmp.lt.s32.totalorder %s140, 1
    %s142 = scalar_select %p141, %s140, 1
    %s143 = smul.addr %s142, 2
    %s144 = scalar_lea.vmem %s3, %s143
    %s145 = sld [smem:[#allocation3]]
    %s146 = sld [smem:[#allocation3]]
    %p147 = scmp.lt.s32.totalorder %s146, 1
    %s148 = scalar_select %p147, %s146, 1
    %s149 = smul.addr %s148, 4
    %s150 = smul.addr %s149, 2
    %s151 = scalar_lea.vmem %s4, %s150
    %s152 = sld [smem:[#allocation3]]
    %s153 = sld [smem:[#allocation3]]
    %s154 = sld [smem:[#allocation3]]
    %p155 = scmp.lt.s32.totalorder %s154, 1
    %s156 = scalar_select %p155, %s154, 1
    %s157 = smul.addr %s156, 2
    %s158 = scalar_lea.vmem %s6, %s157
    %s159 = sld [smem:[#allocation3]]
    %s160 = sld [smem:[#allocation3]]
    %p161 = scmp.lt.s32.totalorder %s160, 1
    %s162 = scalar_select %p161, %s160, 1
    %s163 = smul.addr %s162, 2
    %s164 = scalar_lea.vmem %s11, %s163
    %s165 = sld [smem:[#allocation3]]
    %s166 = sld [smem:[#allocation3]]
    %p167 = scmp.lt.s32.totalorder %s166, 1
    %s168 = scalar_select %p167, %s166, 1
    %s169 = smul.addr %s168, 2
    %s170 = scalar_lea.vmem %s12, %s169
    %s171 = sld [smem:[#allocation3]]
    %s172 = sld [smem:[#allocation3]]
    %p173 = scmp.lt.s32.totalorder %s172, 1
    %s174 = scalar_select %p173, %s172, 1
    %s175 = smul.addr %s174, 4
    %s176 = smul.addr %s175, 2
    %s177 = scalar_lea.vmem %s13, %s176
    %s178 = sld [smem:[#allocation3]]
    %v180 = vld [vmem:[%s1] sm:$0xff]
    %v182 = vcombine.high %v180, %v180
    %v184 = vunpack.c.l.s4 1983009808
    %v185 = vunpack.c.0.s8 %v184
    %v186 = vlaneseq
    %v187 = vshrl.u32 %v186, 7
    %v188 = vsub.s32 %v185, %v187
    %v189 = vrot.slane %v180, %v188
    %v191 = vunpack.c.l.s4 1983009808
    %v192 = vunpack.c.0.s8 %v191
    %v193 = vlaneseq
    %v194 = vshrl.u32 %v193, 7
    %v195 = vsub.s32 %v192, %v194
    %v196 = vrot.slane %v182, %v195
    %v197 = vcombine.high %v189, %v189
    %v198 = vcombine.high %v196, %v196
    %v203 = vpack.c.bf16 %v189, %v189
    %v204 = vpack.c.bf16 %v197, %v197
    %v205 = vpack.c.bf16 %v196, %v196
    %v206 = vpack.c.bf16 %v198, %v198
    %v207 = vld [vmem:[%s138] sm:$0x3]
    %v208 = vld [vmem:[%s144] sm:$0x3]
    %v209 = vld [vmem:[#allocation4] sm:$0xff]
    %v210 = vld [vmem:[#allocation4 + $0x8] sm:$0xff]
    %v211 = vld [vmem:[#allocation4 + $0x10] sm:$0xff]
    %v212 = vld [vmem:[#allocation4 + $0x18] sm:$0xff]
    %v213 = vld [vmem:[#allocation4 + $0x20] sm:$0xff]
    %v214 = vld [vmem:[#allocation4 + $0x28] sm:$0xff]
    %v215 = vld [vmem:[#allocation4 + $0x30] sm:$0xff]
    %v216 = vld [vmem:[#allocation4 + $0x38] sm:$0xff]
    %v217 = vld [vmem:[#allocation4 + $0x40] sm:$0xff]
    %v218 = vld [vmem:[#allocation4 + $0x48] sm:$0xff]
    %v219 = vld [vmem:[#allocation4 + $0x50] sm:$0xff]
    %v220 = vld [vmem:[#allocation4 + $0x58] sm:$0xff]
    %v221 = vld [vmem:[#allocation4 + $0x60] sm:$0xff]
    %v222 = vld [vmem:[#allocation4 + $0x68] sm:$0xff]
    %v223 = vld [vmem:[#allocation4 + $0x70] sm:$0xff]
    %v224 = vld [vmem:[#allocation4 + $0x78] sm:$0xff]
    %v225 = vld [vmem:[#allocation4 + $0x80] sm:$0xff]
    %v226 = vld [vmem:[#allocation4 + $0x88] sm:$0xff]
    %v227 = vld [vmem:[#allocation4 + $0x90] sm:$0xff]
    %v228 = vld [vmem:[#allocation4 + $0x98] sm:$0xff]
    %v229 = vld [vmem:[#allocation4 + $0xa0] sm:$0xff]
    %v230 = vld [vmem:[#allocation4 + $0xa8] sm:$0xff]
    %v231 = vld [vmem:[#allocation4 + $0xb0] sm:$0xff]
    %v232 = vld [vmem:[#allocation4 + $0xb8] sm:$0xff]
    %v233 = vld [vmem:[#allocation4 + $0xc0] sm:$0xff]
    %v234 = vld [vmem:[#allocation4 + $0xc8] sm:$0xff]
    %v235 = vld [vmem:[#allocation4 + $0xd0] sm:$0xff]
    %v236 = vld [vmem:[#allocation4 + $0xd8] sm:$0xff]
    %v237 = vld [vmem:[#allocation4 + $0xe0] sm:$0xff]
    %v238 = vld [vmem:[#allocation4 + $0xe8] sm:$0xff]
    %v239 = vld [vmem:[#allocation4 + $0xf0] sm:$0xff]
    %v240 = vld [vmem:[#allocation4 + $0xf8] sm:$0xff]
    %v241 = vld [vmem:[#allocation4 + $0x100] sm:$0xff]
    %v242 = vld [vmem:[#allocation4 + $0x108] sm:$0xff]
    %v243 = vld [vmem:[#allocation4 + $0x110] sm:$0xff]
    %v244 = vld [vmem:[#allocation4 + $0x118] sm:$0xff]
    %v245 = vld [vmem:[#allocation4 + $0x120] sm:$0xff]
    %v246 = vld [vmem:[#allocation4 + $0x128] sm:$0xff]
    %v247 = vld [vmem:[#allocation4 + $0x130] sm:$0xff]
    %v248 = vld [vmem:[#allocation4 + $0x138] sm:$0xff]
    %v249 = vld [vmem:[#allocation4 + $0x140] sm:$0xff]
    %v250 = vld [vmem:[#allocation4 + $0x148] sm:$0xff]
    %v251 = vld [vmem:[#allocation4 + $0x150] sm:$0xff]
    %v252 = vld [vmem:[#allocation4 + $0x158] sm:$0xff]
    %v253 = vld [vmem:[#allocation4 + $0x160] sm:$0xff]
    %v254 = vld [vmem:[#allocation4 + $0x168] sm:$0xff]
    %v255 = vld [vmem:[#allocation4 + $0x170] sm:$0xff]
    %v256 = vld [vmem:[#allocation4 + $0x178] sm:$0xff]
    %v257 = vld [vmem:[#allocation4 + $0x180] sm:$0xff]
    %v258 = vld [vmem:[#allocation4 + $0x188] sm:$0xff]
    %v259 = vld [vmem:[#allocation4 + $0x190] sm:$0xff]
    %v260 = vld [vmem:[#allocation4 + $0x198] sm:$0xff]
    %v261 = vld [vmem:[#allocation4 + $0x1a0] sm:$0xff]
    %v262 = vld [vmem:[#allocation4 + $0x1a8] sm:$0xff]
    %v263 = vld [vmem:[#allocation4 + $0x1b0] sm:$0xff]
    %v264 = vld [vmem:[#allocation4 + $0x1b8] sm:$0xff]
    %v265 = vld [vmem:[#allocation4 + $0x1c0] sm:$0xff]
    %v266 = vld [vmem:[#allocation4 + $0x1c8] sm:$0xff]
    %v267 = vld [vmem:[#allocation4 + $0x1d0] sm:$0xff]
    %v268 = vld [vmem:[#allocation4 + $0x1d8] sm:$0xff]
    %v269 = vld [vmem:[#allocation4 + $0x1e0] sm:$0xff]
    %v270 = vld [vmem:[#allocation4 + $0x1e8] sm:$0xff]
    %v271 = vld [vmem:[#allocation4 + $0x1f0] sm:$0xff]
    %v272 = vld [vmem:[#allocation4 + $0x1f8] sm:$0xff]
    %v273 = vpack.c.bf16 %v207, %v207
    %v274 = vld [vmem:[#allocation4 + $0x200] sm:$0xff]
    %v275 = vld [vmem:[#allocation4 + $0x208] sm:$0xff]
    %v276 = vld [vmem:[#allocation4 + $0x210] sm:$0xff]
    %v277 = vld [vmem:[#allocation4 + $0x218] sm:$0xff]
    %v278 = vld [vmem:[#allocation4 + $0x220] sm:$0xff]
    %v279 = vld [vmem:[#allocation4 + $0x228] sm:$0xff]
    %v280 = vld [vmem:[#allocation4 + $0x230] sm:$0xff]
    %v281 = vld [vmem:[#allocation4 + $0x238] sm:$0xff]
    %v290 = vunpack.c.l.b16 %v274
    %v291 = vunpack.c.h.b16 %v274
    %v292 = vunpack.c.l.b16 %v275
    %v293 = vunpack.c.h.b16 %v275
    %v294 = vunpack.c.l.b16 %v276
    %v295 = vunpack.c.h.b16 %v276
    %v296 = vunpack.c.l.b16 %v277
    %v297 = vunpack.c.h.b16 %v277
    %v298 = vunpack.c.l.b16 %v278
    %v299 = vunpack.c.h.b16 %v278
    %v300 = vunpack.c.l.b16 %v279
    %v301 = vunpack.c.h.b16 %v279
    %v302 = vunpack.c.l.b16 %v280
    %v303 = vunpack.c.h.b16 %v280
    %v304 = vunpack.c.l.b16 %v281
    %v305 = vunpack.c.h.b16 %v281
    %v306 = vpack.c.b16 %v292, %v290
    %v307 = vpack.c.b16 %v293, %v291
    %v308 = vpack.c.b16 %v296, %v294
    %v309 = vpack.c.b16 %v297, %v295
    %v310 = vpack.c.b16 %v300, %v298
    %v311 = vpack.c.b16 %v301, %v299
    %v312 = vpack.c.b16 %v304, %v302
    %v313 = vpack.c.b16 %v305, %v303
    %vm322 = vcmask 523264
    %v324 = vsel %vm322, %v273, 0
    %326 = vmatprep.subr.bf16.mxu0 %v307
    %327 = vmatpush1.bf16.msra.mxu0 %v306
    %328 = vmatprep.subr.bf16.mxu0 %v309
    %329 = vmatpush1.bf16.msra.mxu0 %v308
    %330 = vmatprep.subr.bf16.mxu0 %v311
    %331 = vmatpush1.bf16.msra.mxu0 %v310
    %332 = vmatprep.subr.bf16.mxu0 %v313
    %333 = vmatpush1.bf16.msra.mxu0 %v312
    %334 = vmatprep.subr.bf16.mxu0 0
    %335 = vmatpush1.bf16.msra.mxu0 0
    %336 = vmatprep.subr.bf16.mxu0 0
    %337 = vmatpush1.bf16.msra.mxu0 0
    %338 = vmatprep.subr.bf16.mxu0 0
    %339 = vmatpush1.bf16.msra.mxu0 0
    %340 = vmatprep.subr.bf16.mxu0 0
    %341 = vmatpush1.bf16.msra.mxu0 0
    %342 = vmatprep.subr.bf16.mxu0 0
    %343 = vmatpush1.bf16.msra.mxu0 0
    %344 = vmatprep.subr.bf16.mxu0 0
    %345 = vmatpush1.bf16.msra.mxu0 0
    %346 = vmatprep.subr.bf16.mxu0 0
    %347 = vmatpush1.bf16.msra.mxu0 0
    %348 = vmatprep.subr.bf16.mxu0 0
    %349 = vmatpush1.bf16.msra.mxu0 0
    %350 = vmatprep.subr.bf16.mxu0 0
    %351 = vmatpush1.bf16.msra.mxu0 0
    %352 = vmatprep.subr.bf16.mxu0 0
    %353 = vmatpush1.bf16.msra.mxu0 0
    %354 = vmatprep.subr.bf16.mxu0 0
    %355 = vmatpush1.bf16.msra.mxu0 0
    %356 = vmatprep.subr.bf16.mxu0 0
    %357 = vmatpush1.bf16.msra.mxu0 0
    %358 = vmatprep.mubr.bf16.mxu0 0
    %359 = vmatmul.mubr.bf16.gmra.mrb[0].mxu0 %v324
    %v360 = vpop.f32.mrb[0].mxu0
    %v361 = vadd.f32 0.0, %v360
    %v362 = vpop.f32.mrb[0].mxu0
    %v363 = vadd.f32 0.0, %v362
    %v364 = vpop.f32.mrb[0].mxu0
    %v365 = vpop.f32.mrb[0].mxu0
    %366 = vdwg.mxu0
    %v431 = vunpack.c.l.b16 %v209
    %v432 = vunpack.c.h.b16 %v209
    %v433 = vunpack.c.l.b16 %v210
    %v434 = vunpack.c.h.b16 %v210
    %v435 = vunpack.c.l.b16 %v211
    %v436 = vunpack.c.h.b16 %v211
    %v437 = vunpack.c.l.b16 %v212
    %v438 = vunpack.c.h.b16 %v212
    %v439 = vunpack.c.l.b16 %v213
    %v440 = vunpack.c.h.b16 %v213
    %v441 = vunpack.c.l.b16 %v214
    %v442 = vunpack.c.h.b16 %v214
    %v443 = vunpack.c.l.b16 %v215
    %v444 = vunpack.c.h.b16 %v215
    %v445 = vunpack.c.l.b16 %v216
    %v446 = vunpack.c.h.b16 %v216
    %v447 = vunpack.c.l.b16 %v217
    %v448 = vunpack.c.h.b16 %v217
    %v449 = vunpack.c.l.b16 %v218
    %v450 = vunpack.c.h.b16 %v218
    %v451 = vunpack.c.l.b16 %v219
    %v452 = vunpack.c.h.b16 %v219
    %v453 = vunpack.c.l.b16 %v220
    %v454 = vunpack.c.h.b16 %v220
    %v455 = vunpack.c.l.b16 %v221
    %v456 = vunpack.c.h.b16 %v221
    %v457 = vunpack.c.l.b16 %v222
    %v458 = vunpack.c.h.b16 %v222
    %v459 = vunpack.c.l.b16 %v223
    %v460 = vunpack.c.h.b16 %v223
    %v461 = vunpack.c.l.b16 %v224
    %v462 = vunpack.c.h.b16 %v224
    %v463 = vunpack.c.l.b16 %v225
    %v464 = vunpack.c.h.b16 %v225
    %v465 = vunpack.c.l.b16 %v226
    %v466 = vunpack.c.h.b16 %v226
    %v467 = vunpack.c.l.b16 %v227
    %v468 = vunpack.c.h.b16 %v227
    %v469 = vunpack.c.l.b16 %v228
    %v470 = vunpack.c.h.b16 %v228
    %v471 = vunpack.c.l.b16 %v229
    %v472 = vunpack.c.h.b16 %v229
    %v473 = vunpack.c.l.b16 %v230
    %v474 = vunpack.c.h.b16 %v230
    %v475 = vunpack.c.l.b16 %v231
    %v476 = vunpack.c.h.b16 %v231
    %v477 = vunpack.c.l.b16 %v232
    %v478 = vunpack.c.h.b16 %v232
    %v479 = vunpack.c.l.b16 %v233
    %v480 = vunpack.c.h.b16 %v233
    %v481 = vunpack.c.l.b16 %v234
    %v482 = vunpack.c.h.b16 %v234
    %v483 = vunpack.c.l.b16 %v235
    %v484 = vunpack.c.h.b16 %v235
    %v485 = vunpack.c.l.b16 %v236
    %v486 = vunpack.c.h.b16 %v236
    %v487 = vunpack.c.l.b16 %v237
    %v488 = vunpack.c.h.b16 %v237
    %v489 = vunpack.c.l.b16 %v238
    %v490 = vunpack.c.h.b16 %v238
    %v491 = vunpack.c.l.b16 %v239
    %v492 = vunpack.c.h.b16 %v239
    %v493 = vunpack.c.l.b16 %v240
    %v494 = vunpack.c.h.b16 %v240
    %v495 = vunpack.c.l.b16 %v241
    %v496 = vunpack.c.h.b16 %v241
    %v497 = vunpack.c.l.b16 %v242
    %v498 = vunpack.c.h.b16 %v242
    %v499 = vunpack.c.l.b16 %v243
    %v500 = vunpack.c.h.b16 %v243
    %v501 = vunpack.c.l.b16 %v244
    %v502 = vunpack.c.h.b16 %v244
    %v503 = vunpack.c.l.b16 %v245
    %v504 = vunpack.c.h.b16 %v245
    %v505 = vunpack.c.l.b16 %v246
    %v506 = vunpack.c.h.b16 %v246
    %v507 = vunpack.c.l.b16 %v247
    %v508 = vunpack.c.h.b16 %v247
    %v509 = vunpack.c.l.b16 %v248
    %v510 = vunpack.c.h.b16 %v248
    %v511 = vunpack.c.l.b16 %v249
    %v512 = vunpack.c.h.b16 %v249
    %v513 = vunpack.c.l.b16 %v250
    %v514 = vunpack.c.h.b16 %v250
    %v515 = vunpack.c.l.b16 %v251
    %v516 = vunpack.c.h.b16 %v251
    %v517 = vunpack.c.l.b16 %v252
    %v518 = vunpack.c.h.b16 %v252
    %v519 = vunpack.c.l.b16 %v253
    %v520 = vunpack.c.h.b16 %v253
    %v521 = vunpack.c.l.b16 %v254
    %v522 = vunpack.c.h.b16 %v254
    %v523 = vunpack.c.l.b16 %v255
    %v524 = vunpack.c.h.b16 %v255
    %v525 = vunpack.c.l.b16 %v256
    %v526 = vunpack.c.h.b16 %v256
    %v527 = vunpack.c.l.b16 %v257
    %v528 = vunpack.c.h.b16 %v257
    %v529 = vunpack.c.l.b16 %v258
    %v530 = vunpack.c.h.b16 %v258
    %v531 = vunpack.c.l.b16 %v259
    %v532 = vunpack.c.h.b16 %v259
    %v533 = vunpack.c.l.b16 %v260
    %v534 = vunpack.c.h.b16 %v260
    %v535 = vunpack.c.l.b16 %v261
    %v536 = vunpack.c.h.b16 %v261
    %v537 = vunpack.c.l.b16 %v262
    %v538 = vunpack.c.h.b16 %v262
    %v539 = vunpack.c.l.b16 %v263
    %v540 = vunpack.c.h.b16 %v263
    %v541 = vunpack.c.l.b16 %v264
    %v542 = vunpack.c.h.b16 %v264
    %v543 = vunpack.c.l.b16 %v265
    %v544 = vunpack.c.h.b16 %v265
    %v545 = vunpack.c.l.b16 %v266
    %v546 = vunpack.c.h.b16 %v266
    %v547 = vunpack.c.l.b16 %v267
    %v548 = vunpack.c.h.b16 %v267
    %v549 = vunpack.c.l.b16 %v268
    %v550 = vunpack.c.h.b16 %v268
    %v551 = vunpack.c.l.b16 %v269
    %v552 = vunpack.c.h.b16 %v269
    %v553 = vunpack.c.l.b16 %v270
    %v554 = vunpack.c.h.b16 %v270
    %v555 = vunpack.c.l.b16 %v271
    %v556 = vunpack.c.h.b16 %v271
    %v557 = vunpack.c.l.b16 %v272
    %v558 = vunpack.c.h.b16 %v272
    %v559 = vpack.c.b16 %v433, %v431
    %v560 = vpack.c.b16 %v434, %v432
    %v561 = vpack.c.b16 %v437, %v435
    %v562 = vpack.c.b16 %v438, %v436
    %v563 = vpack.c.b16 %v441, %v439
    %v564 = vpack.c.b16 %v442, %v440
    %v565 = vpack.c.b16 %v445, %v443
    %v566 = vpack.c.b16 %v446, %v444
    %v567 = vpack.c.b16 %v449, %v447
    %v568 = vpack.c.b16 %v450, %v448
    %v569 = vpack.c.b16 %v453, %v451
    %v570 = vpack.c.b16 %v454, %v452
    %v571 = vpack.c.b16 %v457, %v455
    %v572 = vpack.c.b16 %v458, %v456
    %v573 = vpack.c.b16 %v461, %v459
    %v574 = vpack.c.b16 %v462, %v460
    %v575 = vpack.c.b16 %v465, %v463
    %v576 = vpack.c.b16 %v466, %v464
    %v577 = vpack.c.b16 %v469, %v467
    %v578 = vpack.c.b16 %v470, %v468
    %v579 = vpack.c.b16 %v473, %v471
    %v580 = vpack.c.b16 %v474, %v472
    %v581 = vpack.c.b16 %v477, %v475
    %v582 = vpack.c.b16 %v478, %v476
    %v583 = vpack.c.b16 %v481, %v479
    %v584 = vpack.c.b16 %v482, %v480
    %v585 = vpack.c.b16 %v485, %v483
    %v586 = vpack.c.b16 %v486, %v484
    %v587 = vpack.c.b16 %v489, %v487
    %v588 = vpack.c.b16 %v490, %v488
    %v589 = vpack.c.b16 %v493, %v491
    %v590 = vpack.c.b16 %v494, %v492
    %v591 = vpack.c.b16 %v497, %v495
    %v592 = vpack.c.b16 %v498, %v496
    %v593 = vpack.c.b16 %v501, %v499
    %v594 = vpack.c.b16 %v502, %v500
    %v595 = vpack.c.b16 %v505, %v503
    %v596 = vpack.c.b16 %v506, %v504
    %v597 = vpack.c.b16 %v509, %v507
    %v598 = vpack.c.b16 %v510, %v508
    %v599 = vpack.c.b16 %v513, %v511
    %v600 = vpack.c.b16 %v514, %v512
    %v601 = vpack.c.b16 %v517, %v515
    %v602 = vpack.c.b16 %v518, %v516
    %v603 = vpack.c.b16 %v521, %v519
    %v604 = vpack.c.b16 %v522, %v520
    %v605 = vpack.c.b16 %v525, %v523
    %v606 = vpack.c.b16 %v526, %v524
    %v607 = vpack.c.b16 %v529, %v527
    %v608 = vpack.c.b16 %v530, %v528
    %v609 = vpack.c.b16 %v533, %v531
    %v610 = vpack.c.b16 %v534, %v532
    %v611 = vpack.c.b16 %v537, %v535
    %v612 = vpack.c.b16 %v538, %v536
    %v613 = vpack.c.b16 %v541, %v539
    %v614 = vpack.c.b16 %v542, %v540
    %v615 = vpack.c.b16 %v545, %v543
    %v616 = vpack.c.b16 %v546, %v544
    %v617 = vpack.c.b16 %v549, %v547
    %v618 = vpack.c.b16 %v550, %v548
    %v619 = vpack.c.b16 %v553, %v551
    %v620 = vpack.c.b16 %v554, %v552
    %v621 = vpack.c.b16 %v557, %v555
    %v622 = vpack.c.b16 %v558, %v556
    %687 = vmatprep.subr.bf16.mxu0 %v560
    %688 = vmatpush1.bf16.msra.mxu0 %v559
    %689 = vmatprep.subr.bf16.mxu0 %v562
    %690 = vmatpush1.bf16.msra.mxu0 %v561
    %691 = vmatprep.subr.bf16.mxu0 %v564
    %692 = vmatpush1.bf16.msra.mxu0 %v563
    %693 = vmatprep.subr.bf16.mxu0 %v566
    %694 = vmatpush1.bf16.msra.mxu0 %v565
    %695 = vmatprep.subr.bf16.mxu0 %v568
    %696 = vmatpush1.bf16.msra.mxu0 %v567
    %697 = vmatprep.subr.bf16.mxu0 %v570
    %698 = vmatpush1.bf16.msra.mxu0 %v569
    %699 = vmatprep.subr.bf16.mxu0 %v572
    %700 = vmatpush1.bf16.msra.mxu0 %v571
    %701 = vmatprep.subr.bf16.mxu0 %v574
    %702 = vmatpush1.bf16.msra.mxu0 %v573
    %703 = vmatprep.subr.bf16.mxu0 %v576
    %704 = vmatpush1.bf16.msra.mxu0 %v575
    %705 = vmatprep.subr.bf16.mxu0 %v578
    %706 = vmatpush1.bf16.msra.mxu0 %v577
    %707 = vmatprep.subr.bf16.mxu0 %v580
    %708 = vmatpush1.bf16.msra.mxu0 %v579
    %709 = vmatprep.subr.bf16.mxu0 %v582
    %710 = vmatpush1.bf16.msra.mxu0 %v581
    %711 = vmatprep.subr.bf16.mxu0 %v584
    %712 = vmatpush1.bf16.msra.mxu0 %v583
    %713 = vmatprep.subr.bf16.mxu0 %v586
    %714 = vmatpush1.bf16.msra.mxu0 %v585
    %715 = vmatprep.subr.bf16.mxu0 %v588
    %716 = vmatpush1.bf16.msra.mxu0 %v587
    %717 = vmatprep.subr.bf16.mxu0 %v590
    %718 = vmatpush1.bf16.msra.mxu0 %v589
    %719 = vmatprep.mubr.bf16.mxu0 %v204
    %720 = vmatmul.mubr.bf16.gmra.mrb[0].mxu0 %v203
    %v721 = vpop.f32.mrb[0].mxu0
    %v722 = vadd.f32 %v361, %v721
    %v723 = vpop.f32.mrb[0].mxu0
    %v724 = vadd.f32 %v363, %v723
    %v725 = vpop.f32.mrb[0].mxu0
    %v726 = vpop.f32.mrb[0].mxu0
    %727 = vdwg.mxu0
    %728 = vmatprep.subr.bf16.mxu0 %v592
    %729 = vmatpush1.bf16.msra.mxu0 %v591
    %730 = vmatprep.subr.bf16.mxu0 %v594
    %731 = vmatpush1.bf16.msra.mxu0 %v593
    %732 = vmatprep.subr.bf16.mxu0 %v596
    %733 = vmatpush1.bf16.msra.mxu0 %v595
    %734 = vmatprep.subr.bf16.mxu0 %v598
    %735 = vmatpush1.bf16.msra.mxu0 %v597
    %736 = vmatprep.subr.bf16.mxu0 %v600
    %737 = vmatpush1.bf16.msra.mxu0 %v599
    %738 = vmatprep.subr.bf16.mxu0 %v602
    %739 = vmatpush1.bf16.msra.mxu0 %v601
    %740 = vmatprep.subr.bf16.mxu0 %v604
    %741 = vmatpush1.bf16.msra.mxu0 %v603
    %742 = vmatprep.subr.bf16.mxu0 %v606
    %743 = vmatpush1.bf16.msra.mxu0 %v605
    %744 = vmatprep.subr.bf16.mxu0 %v608
    %745 = vmatpush1.bf16.msra.mxu0 %v607
    %746 = vmatprep.subr.bf16.mxu0 %v610
    %747 = vmatpush1.bf16.msra.mxu0 %v609
    %748 = vmatprep.subr.bf16.mxu0 %v612
    %749 = vmatpush1.bf16.msra.mxu0 %v611
    %750 = vmatprep.subr.bf16.mxu0 %v614
    %751 = vmatpush1.bf16.msra.mxu0 %v613
    %752 = vmatprep.subr.bf16.mxu0 %v616
    %753 = vmatpush1.bf16.msra.mxu0 %v615
    %754 = vmatprep.subr.bf16.mxu0 %v618
    %755 = vmatpush1.bf16.msra.mxu0 %v617
    %756 = vmatprep.subr.bf16.mxu0 %v620
    %757 = vmatpush1.bf16.msra.mxu0 %v619
    %758 = vmatprep.subr.bf16.mxu0 %v622
    %759 = vmatpush1.bf16.msra.mxu0 %v621
    %760 = vmatprep.mubr.bf16.mxu0 %v206
    %761 = vmatmul.mubr.bf16.gmra.mrb[0].mxu0 %v205
    %v762 = vpop.f32.mrb[0].mxu0
    %v763 = vadd.f32 %v722, %v762
    %v764 = vpop.f32.mrb[0].mxu0
    %v765 = vadd.f32 %v724, %v764
    %v766 = vpop.f32.mrb[0].mxu0
    %v767 = vpop.f32.mrb[0].mxu0
    %768 = vdwg.mxu0
    %v769 = vld [vmem:[%s158] sm:$0x3]
    %v771 = vlaneseq
    %v772 = vshrl.u32 %v771, 7
    %v773 = vsub.s32 0, %v772
    %v774 = vrot.slane %v769, %v773
    %v775 = vlaneseq
    %v776 = vshrl.u32 %v775, 7
    %v777 = vsub.s32 1, %v776
    %v778 = vrot.slane %v769, %v777
    %v781 = vadd.f32 %v763, %v774
    %v782 = vadd.f32 %v765, %v778
    %v783 = vxor.u32 %v781, 2147483648
    %v784 = vmul.f32 %v783, 1.442695
    %v785 = vpow.pop %v784
    %v786 = vadd.f32 %v785, 1.0
    %v787 = vrcp.pop %v786
    %v788 = vmul.f32 1.0, %v787
    %v789 = vtanh.pop %v782
    %v790 = vxor.u32 %v782, 2147483648
    %v791 = vmul.f32 %v790, 1.442695
    %v792 = vpow.pop %v791
    %v793 = vadd.f32 %v792, 1.0
    %v794 = vrcp.pop %v793
    %v795 = vmul.f32 1.0, %v794
    %797 = vrot.lane.b32.xlu0 %v208, 64
    %v798 = vpop.permute.xlu0 %797
    %v800 = vmul.f32 %v788, %v798
    %v801 = vmul.f32 %v788, %v789
    %803 = vrot.lane.b32.xlu0 %v801, 64
    %v804 = vpop.permute.xlu0 %803
    %v806 = vadd.f32 %v800, %v804
    %v807 = vtanh.pop %v806
    %v808 = vmul.f32 %v795, %v807
    %810 = vrot.lane.b32.xlu0 %v207, 64
    %v811 = vpop.permute.xlu0 %810
    %v813 = vadd.f32 %v808, %v811
    %815 = vrot.lane.b32.xlu0 %v813, 64
    %v816 = vpop.permute.xlu0 %815
    %vm818 = vcmask 517120
    %819 = vst.msk [vmem:[%s164] sm:$0x3] %vm818, %v816
    %821 = vrot.lane.b32.xlu0 %v806, 64
    %v822 = vpop.permute.xlu0 %821
    %824 = vst.msk [vmem:[%s170] sm:$0x3] %vm818, %v822
    %v825 = vpack.c.bf16 %v813, %v813
    %v826 = vld [vmem:[%s7] sm:$0xf]
    %v827 = vld [vmem:[%s7 + $0x4] sm:$0xf]
    %v828 = vld [vmem:[%s7 + $0x8] sm:$0xf]
    %v829 = vld [vmem:[%s7 + $0xc] sm:$0xf]
    %v830 = vld [vmem:[%s7 + $0x10] sm:$0xf]
    %v831 = vld [vmem:[%s7 + $0x14] sm:$0xf]
    %v832 = vld [vmem:[%s7 + $0x18] sm:$0xf]
    %v833 = vld [vmem:[%s7 + $0x1c] sm:$0xf]
    %v834 = vld [vmem:[%s8] sm:$0x1]
    %v836 = vlaneseq
    %v837 = vshrl.u32 %v836, 7
    %v838 = vsub.s32 0, %v837
    %v839 = vrot.slane %v834, %v838
    %842 = vrot.lane.b32.xlu0 %v825, 64
    %v843 = vpop.permute.xlu0 %842
    %v852 = vunpack.c.l.b16 %v826
    %v853 = vunpack.c.l.b16 %v827
    %v854 = vunpack.c.l.b16 %v828
    %v855 = vunpack.c.l.b16 %v829
    %v856 = vunpack.c.l.b16 %v830
    %v857 = vunpack.c.l.b16 %v831
    %v858 = vunpack.c.l.b16 %v832
    %v859 = vunpack.c.l.b16 %v833
    %v860 = vpack.c.b16 %v853, %v852
    %v861 = vpack.c.b16 %v855, %v854
    %v862 = vpack.c.b16 %v857, %v856
    %v863 = vpack.c.b16 %v859, %v858
    %v869 = vsel %vm322, %v843, 0
    %871 = vmatprep.subr.bf16.mxu0 0
    %872 = vmatpush1.bf16.msra.mxu0 %v860
    %873 = vmatprep.subr.bf16.mxu0 0
    %874 = vmatpush1.bf16.msra.mxu0 %v861
    %875 = vmatprep.subr.bf16.mxu0 0
    %876 = vmatpush1.bf16.msra.mxu0 %v862
    %877 = vmatprep.subr.bf16.mxu0 0
    %878 = vmatpush1.bf16.msra.mxu0 %v863
    %879 = vmatprep.subr.bf16.mxu0 0
    %880 = vmatpush1.bf16.msra.mxu0 0
    %881 = vmatprep.subr.bf16.mxu0 0
    %882 = vmatpush1.bf16.msra.mxu0 0
    %883 = vmatprep.subr.bf16.mxu0 0
    %884 = vmatpush1.bf16.msra.mxu0 0
    %885 = vmatprep.subr.bf16.mxu0 0
    %886 = vmatpush1.bf16.msra.mxu0 0
    %887 = vmatprep.subr.bf16.mxu0 0
    %888 = vmatpush1.bf16.msra.mxu0 0
    %889 = vmatprep.subr.bf16.mxu0 0
    %890 = vmatpush1.bf16.msra.mxu0 0
    %891 = vmatprep.subr.bf16.mxu0 0
    %892 = vmatpush1.bf16.msra.mxu0 0
    %893 = vmatprep.subr.bf16.mxu0 0
    %894 = vmatpush1.bf16.msra.mxu0 0
    %895 = vmatprep.subr.bf16.mxu0 0
    %896 = vmatpush1.bf16.msra.mxu0 0
    %897 = vmatprep.subr.bf16.mxu0 0
    %898 = vmatpush1.bf16.msra.mxu0 0
    %899 = vmatprep.subr.bf16.mxu0 0
    %900 = vmatpush1.bf16.msra.mxu0 0
    %901 = vmatprep.subr.bf16.mxu0 0
    %902 = vmatpush1.bf16.msra.mxu0 0
    %903 = vmatprep.mubr.bf16.mxu0 0
    %904 = vmatmul.mubr.bf16.gmra.mrb[0].mxu0 %v869
    %v905 = vpop.f32.mrb[0].mxu0
    %v906 = vadd.f32 %v839, %v905
    %v907 = vpop.f32.mrb[0].mxu0
    %v908 = vpop.f32.mrb[0].mxu0
    %v909 = vpop.f32.mrb[0].mxu0
    %910 = vdwg.mxu0
    %v911 = vmax.f32 %v906, 0.0
    %v912 = vpack.c.bf16 %v911, %v911
    %v913 = vld [vmem:[#allocation6] sm:$0xff]
    %v914 = vld [vmem:[#allocation6 + $0x8] sm:$0xff]
    %v915 = vld [vmem:[#allocation6 + $0x10] sm:$0xff]
    %v916 = vld [vmem:[#allocation6 + $0x18] sm:$0xff]
    %v917 = vld [vmem:[#allocation6 + $0x20] sm:$0xff]
    %v918 = vld [vmem:[#allocation6 + $0x28] sm:$0xff]
    %v919 = vld [vmem:[#allocation6 + $0x30] sm:$0xff]
    %v920 = vld [vmem:[#allocation6 + $0x38] sm:$0xff]
    %v921 = vld [vmem:[#allocation6 + $0x40] sm:$0xff]
    %v922 = vld [vmem:[#allocation6 + $0x48] sm:$0xff]
    %v923 = vld [vmem:[#allocation6 + $0x50] sm:$0xff]
    %v924 = vld [vmem:[#allocation6 + $0x58] sm:$0xff]
    %v925 = vld [vmem:[#allocation6 + $0x60] sm:$0xff]
    %v926 = vld [vmem:[#allocation6 + $0x68] sm:$0xff]
    %v927 = vld [vmem:[#allocation6 + $0x70] sm:$0xff]
    %v928 = vld [vmem:[#allocation6 + $0x78] sm:$0xff]
    %v929 = vld [vmem:[#allocation6 + $0x80] sm:$0xff]
    %v930 = vld [vmem:[#allocation6 + $0x88] sm:$0xff]
    %v931 = vld [vmem:[#allocation6 + $0x90] sm:$0xff]
    %v932 = vld [vmem:[#allocation6 + $0x98] sm:$0xff]
    %v933 = vld [vmem:[#allocation6 + $0xa0] sm:$0xff]
    %v934 = vld [vmem:[#allocation6 + $0xa8] sm:$0xff]
    %v935 = vld [vmem:[#allocation6 + $0xb0] sm:$0xff]
    %v936 = vld [vmem:[#allocation6 + $0xb8] sm:$0xff]
    %v937 = vld [vmem:[#allocation6 + $0xc0] sm:$0xff]
    %v938 = vld [vmem:[#allocation6 + $0xc8] sm:$0xff]
    %v939 = vld [vmem:[#allocation6 + $0xd0] sm:$0xff]
    %v940 = vld [vmem:[#allocation6 + $0xd8] sm:$0xff]
    %v941 = vld [vmem:[#allocation6 + $0xe0] sm:$0xff]
    %v942 = vld [vmem:[#allocation6 + $0xe8] sm:$0xff]
    %v943 = vld [vmem:[#allocation6 + $0xf0] sm:$0xff]
    %v944 = vld [vmem:[#allocation6 + $0xf8] sm:$0xff]
    %v945 = vld [vmem:[%s10] sm:$0xf]
    %v947 = vlaneseq
    %v948 = vshrl.u32 %v947, 7
    %v949 = vsub.s32 0, %v948
    %v950 = vrot.slane %v945, %v949
    %v951 = vlaneseq
    %v952 = vshrl.u32 %v951, 7
    %v953 = vsub.s32 1, %v952
    %v954 = vrot.slane %v945, %v953
    %v955 = vlaneseq
    %v956 = vshrl.u32 %v955, 7
    %v957 = vsub.s32 2, %v956
    %v958 = vrot.slane %v945, %v957
    %v959 = vlaneseq
    %v960 = vshrl.u32 %v959, 7
    %v961 = vsub.s32 3, %v960
    %v962 = vrot.slane %v945, %v961
    %v999 = vunpack.c.l.b16 %v913
    %v1000 = vunpack.c.h.b16 %v913
    %v1001 = vunpack.c.l.b16 %v914
    %v1002 = vunpack.c.h.b16 %v914
    %v1003 = vunpack.c.l.b16 %v915
    %v1004 = vunpack.c.h.b16 %v915
    %v1005 = vunpack.c.l.b16 %v916
    %v1006 = vunpack.c.h.b16 %v916
    %v1007 = vunpack.c.l.b16 %v917
    %v1008 = vunpack.c.h.b16 %v917
    %v1009 = vunpack.c.l.b16 %v918
    %v1010 = vunpack.c.h.b16 %v918
    %v1011 = vunpack.c.l.b16 %v919
    %v1012 = vunpack.c.h.b16 %v919
    %v1013 = vunpack.c.l.b16 %v920
    %v1014 = vunpack.c.h.b16 %v920
    %v1015 = vunpack.c.l.b16 %v921
    %v1016 = vunpack.c.h.b16 %v921
    %v1017 = vunpack.c.l.b16 %v922
    %v1018 = vunpack.c.h.b16 %v922
    %v1019 = vunpack.c.l.b16 %v923
    %v1020 = vunpack.c.h.b16 %v923
    %v1021 = vunpack.c.l.b16 %v924
    %v1022 = vunpack.c.h.b16 %v924
    %v1023 = vunpack.c.l.b16 %v925
    %v1024 = vunpack.c.h.b16 %v925
    %v1025 = vunpack.c.l.b16 %v926
    %v1026 = vunpack.c.h.b16 %v926
    %v1027 = vunpack.c.l.b16 %v927
    %v1028 = vunpack.c.h.b16 %v927
    %v1029 = vunpack.c.l.b16 %v928
    %v1030 = vunpack.c.h.b16 %v928
    %v1031 = vunpack.c.l.b16 %v929
    %v1032 = vunpack.c.h.b16 %v929
    %v1033 = vunpack.c.l.b16 %v930
    %v1034 = vunpack.c.h.b16 %v930
    %v1035 = vunpack.c.l.b16 %v931
    %v1036 = vunpack.c.h.b16 %v931
    %v1037 = vunpack.c.l.b16 %v932
    %v1038 = vunpack.c.h.b16 %v932
    %v1039 = vunpack.c.l.b16 %v933
    %v1040 = vunpack.c.h.b16 %v933
    %v1041 = vunpack.c.l.b16 %v934
    %v1042 = vunpack.c.h.b16 %v934
    %v1043 = vunpack.c.l.b16 %v935
    %v1044 = vunpack.c.h.b16 %v935
    %v1045 = vunpack.c.l.b16 %v936
    %v1046 = vunpack.c.h.b16 %v936
    %v1047 = vunpack.c.l.b16 %v937
    %v1048 = vunpack.c.h.b16 %v937
    %v1049 = vunpack.c.l.b16 %v938
    %v1050 = vunpack.c.h.b16 %v938
    %v1051 = vunpack.c.l.b16 %v939
    %v1052 = vunpack.c.h.b16 %v939
    %v1053 = vunpack.c.l.b16 %v940
    %v1054 = vunpack.c.h.b16 %v940
    %v1055 = vunpack.c.l.b16 %v941
    %v1056 = vunpack.c.h.b16 %v941
    %v1057 = vunpack.c.l.b16 %v942
    %v1058 = vunpack.c.h.b16 %v942
    %v1059 = vunpack.c.l.b16 %v943
    %v1060 = vunpack.c.h.b16 %v943
    %v1061 = vunpack.c.l.b16 %v944
    %v1062 = vunpack.c.h.b16 %v944
    %v1063 = vpack.c.b16 %v1003, %v999
    %v1064 = vpack.c.b16 %v1004, %v1000
    %v1065 = vpack.c.b16 %v1005, %v1001
    %v1066 = vpack.c.b16 %v1006, %v1002
    %v1067 = vpack.c.b16 %v1011, %v1007
    %v1068 = vpack.c.b16 %v1012, %v1008
    %v1069 = vpack.c.b16 %v1013, %v1009
    %v1070 = vpack.c.b16 %v1014, %v1010
    %v1071 = vpack.c.b16 %v1019, %v1015
    %v1072 = vpack.c.b16 %v1020, %v1016
    %v1073 = vpack.c.b16 %v1021, %v1017
    %v1074 = vpack.c.b16 %v1022, %v1018
    %v1075 = vpack.c.b16 %v1027, %v1023
    %v1076 = vpack.c.b16 %v1028, %v1024
    %v1077 = vpack.c.b16 %v1029, %v1025
    %v1078 = vpack.c.b16 %v1030, %v1026
    %v1079 = vpack.c.b16 %v1035, %v1031
    %v1080 = vpack.c.b16 %v1036, %v1032
    %v1081 = vpack.c.b16 %v1037, %v1033
    %v1082 = vpack.c.b16 %v1038, %v1034
    %v1083 = vpack.c.b16 %v1043, %v1039
    %v1084 = vpack.c.b16 %v1044, %v1040
    %v1085 = vpack.c.b16 %v1045, %v1041
    %v1086 = vpack.c.b16 %v1046, %v1042
    %v1087 = vpack.c.b16 %v1051, %v1047
    %v1088 = vpack.c.b16 %v1052, %v1048
    %v1089 = vpack.c.b16 %v1053, %v1049
    %v1090 = vpack.c.b16 %v1054, %v1050
    %v1091 = vpack.c.b16 %v1059, %v1055
    %v1092 = vpack.c.b16 %v1060, %v1056
    %v1093 = vpack.c.b16 %v1061, %v1057
    %v1094 = vpack.c.b16 %v1062, %v1058
    %1127 = vmatprep.subr.bf16.mxu0 %v1064
    %1128 = vmatpush1.bf16.msra.mxu0 %v1063
    %1129 = vmatprep.subr.bf16.mxu0 %v1068
    %1130 = vmatpush1.bf16.msra.mxu0 %v1067
    %1131 = vmatprep.subr.bf16.mxu0 %v1072
    %1132 = vmatpush1.bf16.msra.mxu0 %v1071
    %1133 = vmatprep.subr.bf16.mxu0 %v1076
    %1134 = vmatpush1.bf16.msra.mxu0 %v1075
    %1135 = vmatprep.subr.bf16.mxu0 %v1080
    %1136 = vmatpush1.bf16.msra.mxu0 %v1079
    %1137 = vmatprep.subr.bf16.mxu0 %v1084
    %1138 = vmatpush1.bf16.msra.mxu0 %v1083
    %1139 = vmatprep.subr.bf16.mxu0 %v1088
    %1140 = vmatpush1.bf16.msra.mxu0 %v1087
    %1141 = vmatprep.subr.bf16.mxu0 %v1092
    %1142 = vmatpush1.bf16.msra.mxu0 %v1091
    %1143 = vmatprep.subr.bf16.mxu0 0
    %1144 = vmatpush1.bf16.msra.mxu0 0
    %1145 = vmatprep.subr.bf16.mxu0 0
    %1146 = vmatpush1.bf16.msra.mxu0 0
    %1147 = vmatprep.subr.bf16.mxu0 0
    %1148 = vmatpush1.bf16.msra.mxu0 0
    %1149 = vmatprep.subr.bf16.mxu0 0
    %1150 = vmatpush1.bf16.msra.mxu0 0
    %1151 = vmatprep.subr.bf16.mxu0 0
    %1152 = vmatpush1.bf16.msra.mxu0 0
    %1153 = vmatprep.subr.bf16.mxu0 0
    %1154 = vmatpush1.bf16.msra.mxu0 0
    %1155 = vmatprep.subr.bf16.mxu0 0
    %1156 = vmatpush1.bf16.msra.mxu0 0
    %1157 = vmatprep.subr.bf16.mxu0 0
    %1158 = vmatpush1.bf16.msra.mxu0 0
    %1159 = vmatprep.mubr.bf16.mxu0 0
    %1160 = vmatmul.mubr.bf16.gmra.mrb[0].mxu0 %v912
    %v1161 = vpop.f32.mrb[0].mxu0
    %v1162 = vadd.f32 %v950, %v1161
    %v1163 = vpop.f32.mrb[0].mxu0
    %v1164 = vadd.f32 %v954, %v1163
    %v1165 = vpop.f32.mrb[0].mxu0
    %v1166 = vpop.f32.mrb[0].mxu0
    %1167 = vdwg.mxu0
    %1168 = vmatprep.subr.bf16.mxu0 %v1066
    %1169 = vmatpush1.bf16.msra.mxu0 %v1065
    %1170 = vmatprep.subr.bf16.mxu0 %v1070
    %1171 = vmatpush1.bf16.msra.mxu0 %v1069
    %1172 = vmatprep.subr.bf16.mxu0 %v1074
    %1173 = vmatpush1.bf16.msra.mxu0 %v1073
    %1174 = vmatprep.subr.bf16.mxu0 %v1078
    %1175 = vmatpush1.bf16.msra.mxu0 %v1077
    %1176 = vmatprep.subr.bf16.mxu0 %v1082
    %1177 = vmatpush1.bf16.msra.mxu0 %v1081
    %1178 = vmatprep.subr.bf16.mxu0 %v1086
    %1179 = vmatpush1.bf16.msra.mxu0 %v1085
    %1180 = vmatprep.subr.bf16.mxu0 %v1090
    %1181 = vmatpush1.bf16.msra.mxu0 %v1089
    %1182 = vmatprep.subr.bf16.mxu0 %v1094
    %1183 = vmatpush1.bf16.msra.mxu0 %v1093
    %1184 = vmatprep.subr.bf16.mxu0 0
    %1185 = vmatpush1.bf16.msra.mxu0 0
    %1186 = vmatprep.subr.bf16.mxu0 0
    %1187 = vmatpush1.bf16.msra.mxu0 0
    %1188 = vmatprep.subr.bf16.mxu0 0
    %1189 = vmatpush1.bf16.msra.mxu0 0
    %1190 = vmatprep.subr.bf16.mxu0 0
    %1191 = vmatpush1.bf16.msra.mxu0 0
    %1192 = vmatprep.subr.bf16.mxu0 0
    %1193 = vmatpush1.bf16.msra.mxu0 0
    %1194 = vmatprep.subr.bf16.mxu0 0
    %1195 = vmatpush1.bf16.msra.mxu0 0
    %1196 = vmatprep.subr.bf16.mxu0 0
    %1197 = vmatpush1.bf16.msra.mxu0 0
    %1198 = vmatprep.subr.bf16.mxu0 0
    %1199 = vmatpush1.bf16.msra.mxu0 0
    %1200 = vmatprep.mubr.bf16.mxu0 0
    %1201 = vmatmul.mubr.bf16.gmra.mrb[0].mxu0 %v912
    %v1202 = vpop.f32.mrb[0].mxu0
    %v1203 = vadd.f32 %v958, %v1202
    %v1204 = vpop.f32.mrb[0].mxu0
    %v1205 = vadd.f32 %v962, %v1204
    %v1206 = vpop.f32.mrb[0].mxu0
    %v1207 = vpop.f32.mrb[0].mxu0
    %1208 = vdwg.mxu0
    %v1213 = vcombine.low %v1162, %v1164
    %v1214 = vcombine.low %v1203, %v1205
    %v1216 = vunpack.c.l.s4 1983009808
    %v1217 = vunpack.c.0.s8 %v1216
    %v1218 = vlaneseq
    %v1219 = vshrl.u32 %v1218, 7
    %v1220 = vsub.s32 %v1217, %v1219
    %v1221 = vrot.slane %v1213, %v1220
    %v1223 = vunpack.c.l.s4 1983009808
    %v1224 = vunpack.c.0.s8 %v1223
    %v1225 = vlaneseq
    %v1226 = vshrl.u32 %v1225, 7
    %v1227 = vsub.s32 %v1224, %v1226
    %v1228 = vrot.slane %v1214, %v1227
    %v1229 = vcombine.low %v1221, %v1228
    %1231 = vst [vmem:[%s177] sm:$0xff] %v1229
    %s1232 = sld [smem:[#allocation3]]
    %p1233 = scmp.lt.s32.totalorder %s1232, 1
    %s1234 = scalar_select %p1233, %s1232, 1
    %s1235 = smul.addr %s1234, 2
    %s1236 = scalar_lea.vmem %s11, %s1235
    %s1237 = sld [smem:[#allocation3]]
    %p1238 = scmp.lt.s32.totalorder %s1237, 1
    %s1239 = scalar_select %p1238, %s1237, 1
    %s1240 = smul.addr %s1239, 2
    %s1241 = scalar_lea.vmem %s12, %s1240
    %s1242 = sld [smem:[#allocation3]]
    %p1243 = scmp.lt.s32.totalorder %s1242, 1
    %s1244 = scalar_select %p1243, %s1242, 1
    %s1245 = smul.addr %s1244, 4
    %s1246 = smul.addr %s1245, 2
    %s1247 = scalar_lea.vmem %s13, %s1246
    // Predicated region
    $region50: #{center_point_lstm_forward.1} parent=1 // pred_check
      _
    $region51: #{center_point_lstm_forward.1} parent=1 // pred_check_branch
      %1249 = sbr.rel (0) target = $region53
    $region52: #{center_point_lstm_forward.1} parent=1 // pred_region
      %s1250 = sld [smem:[#allocation3]]
    $region53: #{center_point_lstm_forward.1} parent=1 // pred_fallthru
      _
    // Predicated region
    $region54: #{center_point_lstm_forward.1} parent=1 // pred_check
      _
    $region55: #{center_point_lstm_forward.1} parent=1 // pred_check_branch
      %1252 = sbr.rel (0) target = $region57
    $region56: #{center_point_lstm_forward.1} parent=1 // pred_region
      %s1253 = sld [smem:[#allocation3]]
    $region57: #{center_point_lstm_forward.1} parent=1 // pred_fallthru
      _
    // Predicated region
    $region58: #{center_point_lstm_forward.1} parent=1 // pred_check
      _
    $region59: #{center_point_lstm_forward.1} parent=1 // pred_check_branch
      %1255 = sbr.rel (0) target = $region61
    $region60: #{center_point_lstm_forward.1} parent=1 // pred_region
      %s1256 = sld [smem:[#allocation3]]
    $region61: #{center_point_lstm_forward.1} parent=1 // pred_fallthru
      _
    // Predicated region
    $region62: #{center_point_lstm_forward.1} parent=1 // pred_check
      _
    $region63: #{center_point_lstm_forward.1} parent=1 // pred_check_branch
      %1258 = sbr.rel (0) target = $region65
    $region64: #{center_point_lstm_forward.1} parent=1 // pred_region
      %s1259 = sld [smem:[#allocation3]]
      %p1260 = scmp.lt.s32.totalorder %s1259, 1
      %s1261 = scalar_select %p1260, %s1259, 1
      %s1262 = smul.addr %s1261, 2
      %s1263 = scalar_lea.vmem %s11, %s1262
    $region65: #{center_point_lstm_forward.1} parent=1 // pred_fallthru
      _
    // Predicated region
    $region66: #{center_point_lstm_forward.1} parent=1 // pred_check
      _
    $region67: #{center_point_lstm_forward.1} parent=1 // pred_check_branch
      %1265 = sbr.rel (0) target = $region69
    $region68: #{center_point_lstm_forward.1} parent=1 // pred_region
      %s1266 = sld [smem:[#allocation3]]
      %p1267 = scmp.lt.s32.totalorder %s1266, 1
      %s1268 = scalar_select %p1267, %s1266, 1
      %s1269 = smul.addr %s1268, 2
      %s1270 = scalar_lea.vmem %s12, %s1269
    $region69: #{center_point_lstm_forward.1} parent=1 // pred_fallthru
      _
    // Predicated region
    $region70: #{center_point_lstm_forward.1} parent=1 // pred_check
      _
    $region71: #{center_point_lstm_forward.1} parent=1 // pred_check_branch
      %1272 = sbr.rel (0) target = $region73
    $region72: #{center_point_lstm_forward.1} parent=1 // pred_region
      %s1273 = sld [smem:[#allocation3]]
      %p1274 = scmp.lt.s32.totalorder %s1273, 1
      %s1275 = scalar_select %p1274, %s1273, 1
      %s1276 = smul.addr %s1275, 4
      %s1277 = smul.addr %s1276, 2
      %s1278 = scalar_lea.vmem %s13, %s1277
    $region73: #{center_point_lstm_forward.1} parent=1 // pred_fallthru
      _
    %1279 = vsyncpa [#allocation5], 1
    %1280 = vsyncpa [#allocation7], 1

</llo_original>
